<compile_context>
chip_gen: v6e
topology: v6e:2x2x1
jax: 0.10.0
libtpu: 0.0.40
codegen_flags: <defaults>
</compile_context>

<pallas_src>
import functools

import jax
import jax.numpy as jnp
from jax.experimental import pallas as pl
from jax.experimental.pallas import tpu as pltpu


def policy_kernel(x_ref, h0_ref, c0_ref,
                  w1t_ref, b1_ref,
                  wiht_ref, whht_ref, bias_ref,
                  w2t_ref, b2_ref,
                  probs_ref, hout_ref, cout_ref,
                  xg_ref, hseq_ref,
                  *, S, B, H):
    # ---- linear1 + ReLU over all timesteps (single MXU matmul) ----
    x1 = jnp.maximum(
        jnp.dot(x_ref[...], w1t_ref[...], preferred_element_type=jnp.float32)
        + b1_ref[...], 0.0)                                        # (S*B, H)

    # ---- LSTM input projection hoisted out of the recurrence ----
    # Lane-aligned last dim (4H = 128); biases folded in once.
    xg_ref[...] = (jnp.dot(x1, wiht_ref[...],
                           preferred_element_type=jnp.float32)
                   + bias_ref[...])                                # (S*B, 4H)

    whht = whht_ref[...]                                           # (H, 4H)
    h = h0_ref[...]                                                # (B, H), register-carried
    c = c0_ref[...]                                                # (B, H), register-carried

    # ---- fully-unrolled recurrence (S static): one (B,H)x(H,4H) matmul / step ----
    for t in range(S):
        gates = (xg_ref[pl.ds(t * B, B), :]
                 + jnp.dot(h, whht, preferred_element_type=jnp.float32))  # (B, 4H)
        sig = jax.nn.sigmoid(gates)      # one EUP pass covers i, f, o
        tnh = jnp.tanh(gates)            # one EUP pass covers g
        i_g = sig[:, 0 * H:1 * H]
        f_g = sig[:, 1 * H:2 * H]
        g_g = tnh[:, 2 * H:3 * H]
        o_g = sig[:, 3 * H:4 * H]
        c = f_g * c + i_g * g_g
        h = o_g * jnp.tanh(c)
        hseq_ref[pl.ds(t * B, B), :] = h

    hout_ref[...] = h
    cout_ref[...] = c

    # ---- linear2 + softmax over the action dim, batched over all timesteps ----
    logits = (jnp.dot(hseq_ref[...], w2t_ref[...],
                      preferred_element_type=jnp.float32) + b2_ref[...])   # (S*B, A)
    logits = logits - jnp.max(logits, axis=-1, keepdims=True)
    e = jnp.exp(logits)
    denom = jnp.sum(e, axis=-1, keepdims=True)
    probs_ref[...] = e * pl.reciprocal(denom, approx=False)   # exact -> sum==1 holds


def policy_forward(x, h, c, params):
    S, B, H = x.shape
    A = params["w2"].shape[0]

    # Wrapper-side layout plumbing: flatten activations, pre-transpose weights,
    # pre-sum the two LSTM biases (all free in XLA).
    x2d = x.reshape(S * B, H)
    h2d = h.reshape(B, H)
    c2d = c.reshape(B, H)
    w1t = params["w1"].T                                    # (H, H)
    wiht = params["wih"].T                                   # (H, 4H)
    whht = params["whh"].T                                   # (H, 4H)
    w2t = params["w2"].T                                     # (H, A)
    b1 = params["b1"].reshape(1, H)
    bias = (params["bih"] + params["bhh"]).reshape(1, 4 * H)
    b2 = params["b2"].reshape(1, A)

    vmem = pl.BlockSpec(memory_space=pltpu.MemorySpace.VMEM)
    kernel = functools.partial(policy_kernel, S=S, B=B, H=H)

    probs2d, hout, cout = pl.pallas_call(
        kernel,
        out_shape=(jax.ShapeDtypeStruct((S * B, A), jnp.float32),
                   jax.ShapeDtypeStruct((B, H), jnp.float32),
                   jax.ShapeDtypeStruct((B, H), jnp.float32)),
        in_specs=[vmem] * 10,
        out_specs=(vmem, vmem, vmem),
        scratch_shapes=[pltpu.VMEM((S * B, 4 * H), jnp.float32),  # hoisted input projection
                        pltpu.VMEM((S * B, H), jnp.float32)],     # lstm hidden sequence
    )(x2d, h2d, c2d, w1t, b1, wiht, whht, bias, w2t, b2)

    return (probs2d.reshape(S, B, A),
            hout.reshape(1, B, H),
            cout.reshape(1, B, H))


def policy_forward_ref(x, h, c, params):
    """Pure-JAX reference matching PyTorch semantics."""
    S, B, H = x.shape
    x1 = jnp.maximum(jnp.einsum("sbi,oi->sbo", x, params["w1"]) + params["b1"], 0.0)
    wih_t, whh_t = params["wih"].T, params["whh"].T
    bias = params["bih"] + params["bhh"]

    def step(carry, xt):
        h, c = carry
        gates = xt @ wih_t + h @ whh_t + bias
        i_g = jax.nn.sigmoid(gates[:, 0 * H:1 * H])
        f_g = jax.nn.sigmoid(gates[:, 1 * H:2 * H])
        g_g = jnp.tanh(gates[:, 2 * H:3 * H])
        o_g = jax.nn.sigmoid(gates[:, 3 * H:4 * H])
        c_new = f_g * c + i_g * g_g
        h_new = o_g * jnp.tanh(c_new)
        return (h_new, c_new), h_new

    (h_f, c_f), hseq = jax.lax.scan(step, (h[0], c[0]), x1)
    logits = jnp.einsum("sbh,ah->sba", hseq, params["w2"]) + params["b2"]
    probs = jax.nn.softmax(logits, axis=2)
    return probs, h_f[None], c_f[None]


def init_params(key, state_space, action_space):
    H, A = state_space, action_space
    keys = jax.random.split(key, 8)

    def xavier(k, shape):
        bound = (6.0 / (shape[0] + shape[1])) ** 0.5
        return jax.random.uniform(k, shape, jnp.float32, -bound, bound)

    def uni(k, shape, fan):
        bound = 1.0 / (fan ** 0.5)
        return jax.random.uniform(k, shape, jnp.float32, -bound, bound)

    return {
        "w1": xavier(keys[0], (H, H)),          # linear1.weight
        "b1": uni(keys[1], (H,), H),            # linear1.bias
        "wih": uni(keys[2], (4 * H, H), H),     # lstm.weight_ih_l0
        "whh": uni(keys[3], (4 * H, H), H),     # lstm.weight_hh_l0
        "bih": uni(keys[4], (4 * H,), H),       # lstm.bias_ih_l0
        "bhh": uni(keys[5], (4 * H,), H),       # lstm.bias_hh_l0
        "w2": xavier(keys[6], (A, H)),          # linear2.weight
        "b2": uni(keys[7], (A,), H),            # linear2.bias
    }


if __name__ == "__main__":
    state_space = 32      # hidden_space == state_space in the module
    action_space = 4
    seq, batch = 8, 2

    key = jax.random.PRNGKey(0)
    kp, kx = jax.random.split(key)
    params = init_params(kp, state_space, action_space)

    x = jax.random.normal(kx, (seq, batch, state_space), jnp.float32)
    h0 = jnp.zeros((1, batch, state_space), jnp.float32)   # init_hidden_state()
    c0 = jnp.zeros((1, batch, state_space), jnp.float32)

    probs, new_h, new_c = jax.block_until_ready(policy_forward(x, h0, c0, params))
    probs_r, new_h_r, new_c_r = policy_forward_ref(x, h0, c0, params)

    assert probs.shape == (seq, batch, action_space)
    assert new_h.shape == (1, batch, state_space) and new_c.shape == (1, batch, state_space)
    assert jnp.allclose(probs, probs_r, atol=1e-3, rtol=1e-3)
    assert jnp.allclose(new_h, new_h_r, atol=1e-3, rtol=1e-3)
    assert jnp.allclose(new_c, new_c_r, atol=1e-3, rtol=1e-3)
    assert jnp.allclose(jnp.sum(probs, axis=2), 1.0, atol=1e-5)

    print("KERNEL_OK")
</pallas_src>

<mosaic_0001>
module attributes {stable_mosaic.version = 11 : i64} {
  func.func @policy_kernel(%arg0: memref<16x32xf32, #tpu.memory_space<vmem>>, %arg1: memref<2x32xf32, #tpu.memory_space<vmem>>, %arg2: memref<2x32xf32, #tpu.memory_space<vmem>>, %arg3: memref<32x32xf32, #tpu.memory_space<vmem>>, %arg4: memref<1x32xf32, #tpu.memory_space<vmem>>, %arg5: memref<32x128xf32, #tpu.memory_space<vmem>>, %arg6: memref<32x128xf32, #tpu.memory_space<vmem>>, %arg7: memref<1x128xf32, #tpu.memory_space<vmem>>, %arg8: memref<32x4xf32, #tpu.memory_space<vmem>>, %arg9: memref<1x4xf32, #tpu.memory_space<vmem>>, %arg10: memref<16x4xf32, #tpu.memory_space<vmem>>, %arg11: memref<2x32xf32, #tpu.memory_space<vmem>>, %arg12: memref<2x32xf32, #tpu.memory_space<vmem>>, %arg13: memref<16x128xf32, #tpu.memory_space<vmem>>, %arg14: memref<16x32xf32, #tpu.memory_space<vmem>>) attributes {dimension_semantics = [], scalar_prefetch = 0 : i64, scratch_operands = 2 : i64, tpu.core_type = #tpu.core_type<tc>} {
    %c0 = arith.constant 0 : index
    %c0_0 = arith.constant 0 : index
    %0 = vector.load %arg0[%c0, %c0_0] : memref<16x32xf32, #tpu.memory_space<vmem>>, vector<16x32xf32>
    %c0_1 = arith.constant 0 : index
    %c0_2 = arith.constant 0 : index
    %1 = vector.load %arg3[%c0_1, %c0_2] : memref<32x32xf32, #tpu.memory_space<vmem>>, vector<32x32xf32>
    %cst = arith.constant dense<0.000000e+00> : vector<16x32xf32>
    %2 = tpu.matmul %0, %1, %cst {dimension_numbers = #tpu.dot_dimension_numbers<[1], [0], [0], [1], [0, 0, 1, 1], [], []>} : vector<16x32xf32>, vector<32x32xf32>, vector<16x32xf32> -> vector<16x32xf32>
    %c0_3 = arith.constant 0 : index
    %c0_4 = arith.constant 0 : index
    %3 = vector.load %arg4[%c0_3, %c0_4] : memref<1x32xf32, #tpu.memory_space<vmem>>, vector<1x32xf32>
    %4 = vector.broadcast %3 : vector<1x32xf32> to vector<16x32xf32>
    %5 = arith.addf %2, %4 : vector<16x32xf32>
    %cst_5 = arith.constant 0.000000e+00 : f32
    %6 = vector.broadcast %cst_5 : f32 to vector<16x32xf32>
    %7 = arith.maximumf %5, %6 : vector<16x32xf32>
    %c0_6 = arith.constant 0 : index
    %c0_7 = arith.constant 0 : index
    %8 = vector.load %arg5[%c0_6, %c0_7] : memref<32x128xf32, #tpu.memory_space<vmem>>, vector<32x128xf32>
    %cst_8 = arith.constant dense<0.000000e+00> : vector<16x128xf32>
    %9 = tpu.matmul %7, %8, %cst_8 {dimension_numbers = #tpu.dot_dimension_numbers<[1], [0], [0], [1], [0, 0, 1, 1], [], []>} : vector<16x32xf32>, vector<32x128xf32>, vector<16x128xf32> -> vector<16x128xf32>
    %c0_9 = arith.constant 0 : index
    %c0_10 = arith.constant 0 : index
    %10 = vector.load %arg7[%c0_9, %c0_10] : memref<1x128xf32, #tpu.memory_space<vmem>>, vector<1x128xf32>
    %11 = vector.broadcast %10 : vector<1x128xf32> to vector<16x128xf32>
    %12 = arith.addf %9, %11 : vector<16x128xf32>
    %c0_11 = arith.constant 0 : index
    %c0_12 = arith.constant 0 : index
    %13 = vector.load %arg13[%c0_11, %c0_12] : memref<16x128xf32, #tpu.memory_space<vmem>>, vector<16x128xf32>
    tpu.vector_store %arg13[%c0_11, %c0_12], %12 {strides = array<i32>} : memref<16x128xf32, #tpu.memory_space<vmem>>, vector<16x128xf32>,
    %c0_13 = arith.constant 0 : index
    %c0_14 = arith.constant 0 : index
    %14 = vector.load %arg6[%c0_13, %c0_14] : memref<32x128xf32, #tpu.memory_space<vmem>>, vector<32x128xf32>
    %c0_15 = arith.constant 0 : index
    %c0_16 = arith.constant 0 : index
    %15 = vector.load %arg1[%c0_15, %c0_16] : memref<2x32xf32, #tpu.memory_space<vmem>>, vector<2x32xf32>
    %c0_17 = arith.constant 0 : index
    %c0_18 = arith.constant 0 : index
    %16 = vector.load %arg2[%c0_17, %c0_18] : memref<2x32xf32, #tpu.memory_space<vmem>>, vector<2x32xf32>
    %c0_19 = arith.constant 0 : index
    %c0_20 = arith.constant 0 : index
    %17 = vector.load %arg13[%c0_19, %c0_20] : memref<16x128xf32, #tpu.memory_space<vmem>>, vector<2x128xf32>
    %cst_21 = arith.constant dense<0.000000e+00> : vector<2x128xf32>
    %18 = tpu.matmul %15, %14, %cst_21 {dimension_numbers = #tpu.dot_dimension_numbers<[1], [0], [0], [1], [0, 0, 1, 1], [], []>} : vector<2x32xf32>, vector<32x128xf32>, vector<2x128xf32> -> vector<2x128xf32>
    %19 = arith.addf %17, %18 : vector<2x128xf32>
    %20 = arith.negf %19 : vector<2x128xf32>
    %21 = math.exp %20 : vector<2x128xf32>
    %cst_22 = arith.constant 1.000000e+00 : f32
    %22 = vector.broadcast %cst_22 : f32 to vector<2x128xf32>
    %23 = arith.addf %22, %21 : vector<2x128xf32>
    %24 = arith.divf %22, %23 : vector<2x128xf32>
    %25 = math.tanh %19 : vector<2x128xf32>
    %26 = vector.extract_strided_slice %24 {offsets = [0, 0], sizes = [2, 32], strides = [1, 1]} : vector<2x128xf32> to vector<2x32xf32>
    %27 = vector.extract_strided_slice %24 {offsets = [0, 32], sizes = [2, 32], strides = [1, 1]} : vector<2x128xf32> to vector<2x32xf32>
    %28 = vector.extract_strided_slice %25 {offsets = [0, 64], sizes = [2, 32], strides = [1, 1]} : vector<2x128xf32> to vector<2x32xf32>
    %29 = vector.extract_strided_slice %24 {offsets = [0, 96], sizes = [2, 32], strides = [1, 1]} : vector<2x128xf32> to vector<2x32xf32>
    %30 = arith.mulf %27, %16 : vector<2x32xf32>
    %31 = arith.mulf %26, %28 : vector<2x32xf32>
    %32 = arith.addf %30, %31 : vector<2x32xf32>
    %33 = math.tanh %32 : vector<2x32xf32>
    %34 = arith.mulf %29, %33 : vector<2x32xf32>
    %c0_23 = arith.constant 0 : index
    %c0_24 = arith.constant 0 : index
    %35 = vector.load %arg14[%c0_23, %c0_24] : memref<16x32xf32, #tpu.memory_space<vmem>>, vector<2x32xf32>
    tpu.vector_store %arg14[%c0_23, %c0_24], %34 {strides = array<i32>} : memref<16x32xf32, #tpu.memory_space<vmem>>, vector<2x32xf32>,
    %c2 = arith.constant 2 : index
    %c0_25 = arith.constant 0 : index
    %36 = vector.load %arg13[%c2, %c0_25] : memref<16x128xf32, #tpu.memory_space<vmem>>, vector<2x128xf32>
    %cst_26 = arith.constant dense<0.000000e+00> : vector<2x128xf32>
    %37 = tpu.matmul %34, %14, %cst_26 {dimension_numbers = #tpu.dot_dimension_numbers<[1], [0], [0], [1], [0, 0, 1, 1], [], []>} : vector<2x32xf32>, vector<32x128xf32>, vector<2x128xf32> -> vector<2x128xf32>
    %38 = arith.addf %36, %37 : vector<2x128xf32>
    %39 = arith.negf %38 : vector<2x128xf32>
    %40 = math.exp %39 : vector<2x128xf32>
    %cst_27 = arith.constant 1.000000e+00 : f32
    %41 = vector.broadcast %cst_27 : f32 to vector<2x128xf32>
    %42 = arith.addf %41, %40 : vector<2x128xf32>
    %43 = arith.divf %41, %42 : vector<2x128xf32>
    %44 = math.tanh %38 : vector<2x128xf32>
    %45 = vector.extract_strided_slice %43 {offsets = [0, 0], sizes = [2, 32], strides = [1, 1]} : vector<2x128xf32> to vector<2x32xf32>
    %46 = vector.extract_strided_slice %43 {offsets = [0, 32], sizes = [2, 32], strides = [1, 1]} : vector<2x128xf32> to vector<2x32xf32>
    %47 = vector.extract_strided_slice %44 {offsets = [0, 64], sizes = [2, 32], strides = [1, 1]} : vector<2x128xf32> to vector<2x32xf32>
    %48 = vector.extract_strided_slice %43 {offsets = [0, 96], sizes = [2, 32], strides = [1, 1]} : vector<2x128xf32> to vector<2x32xf32>
    %49 = arith.mulf %46, %32 : vector<2x32xf32>
    %50 = arith.mulf %45, %47 : vector<2x32xf32>
    %51 = arith.addf %49, %50 : vector<2x32xf32>
    %52 = math.tanh %51 : vector<2x32xf32>
    %53 = arith.mulf %48, %52 : vector<2x32xf32>
    %c2_28 = arith.constant 2 : index
    %c0_29 = arith.constant 0 : index
    %54 = vector.load %arg14[%c2_28, %c0_29] : memref<16x32xf32, #tpu.memory_space<vmem>>, vector<2x32xf32>
    tpu.vector_store %arg14[%c2_28, %c0_29], %53 {strides = array<i32>} : memref<16x32xf32, #tpu.memory_space<vmem>>, vector<2x32xf32>,
    %c4 = arith.constant 4 : index
    %c0_30 = arith.constant 0 : index
    %55 = vector.load %arg13[%c4, %c0_30] : memref<16x128xf32, #tpu.memory_space<vmem>>, vector<2x128xf32>
    %cst_31 = arith.constant dense<0.000000e+00> : vector<2x128xf32>
    %56 = tpu.matmul %53, %14, %cst_31 {dimension_numbers = #tpu.dot_dimension_numbers<[1], [0], [0], [1], [0, 0, 1, 1], [], []>} : vector<2x32xf32>, vector<32x128xf32>, vector<2x128xf32> -> vector<2x128xf32>
    %57 = arith.addf %55, %56 : vector<2x128xf32>
    %58 = arith.negf %57 : vector<2x128xf32>
    %59 = math.exp %58 : vector<2x128xf32>
    %cst_32 = arith.constant 1.000000e+00 : f32
    %60 = vector.broadcast %cst_32 : f32 to vector<2x128xf32>
    %61 = arith.addf %60, %59 : vector<2x128xf32>
    %62 = arith.divf %60, %61 : vector<2x128xf32>
    %63 = math.tanh %57 : vector<2x128xf32>
    %64 = vector.extract_strided_slice %62 {offsets = [0, 0], sizes = [2, 32], strides = [1, 1]} : vector<2x128xf32> to vector<2x32xf32>
    %65 = vector.extract_strided_slice %62 {offsets = [0, 32], sizes = [2, 32], strides = [1, 1]} : vector<2x128xf32> to vector<2x32xf32>
    %66 = vector.extract_strided_slice %63 {offsets = [0, 64], sizes = [2, 32], strides = [1, 1]} : vector<2x128xf32> to vector<2x32xf32>
    %67 = vector.extract_strided_slice %62 {offsets = [0, 96], sizes = [2, 32], strides = [1, 1]} : vector<2x128xf32> to vector<2x32xf32>
    %68 = arith.mulf %65, %51 : vector<2x32xf32>
    %69 = arith.mulf %64, %66 : vector<2x32xf32>
    %70 = arith.addf %68, %69 : vector<2x32xf32>
    %71 = math.tanh %70 : vector<2x32xf32>
    %72 = arith.mulf %67, %71 : vector<2x32xf32>
    %c4_33 = arith.constant 4 : index
    %c0_34 = arith.constant 0 : index
    %73 = vector.load %arg14[%c4_33, %c0_34] : memref<16x32xf32, #tpu.memory_space<vmem>>, vector<2x32xf32>
    tpu.vector_store %arg14[%c4_33, %c0_34], %72 {strides = array<i32>} : memref<16x32xf32, #tpu.memory_space<vmem>>, vector<2x32xf32>,
    %c6 = arith.constant 6 : index
    %c0_35 = arith.constant 0 : index
    %74 = vector.load %arg13[%c6, %c0_35] : memref<16x128xf32, #tpu.memory_space<vmem>>, vector<2x128xf32>
    %cst_36 = arith.constant dense<0.000000e+00> : vector<2x128xf32>
    %75 = tpu.matmul %72, %14, %cst_36 {dimension_numbers = #tpu.dot_dimension_numbers<[1], [0], [0], [1], [0, 0, 1, 1], [], []>} : vector<2x32xf32>, vector<32x128xf32>, vector<2x128xf32> -> vector<2x128xf32>
    %76 = arith.addf %74, %75 : vector<2x128xf32>
    %77 = arith.negf %76 : vector<2x128xf32>
    %78 = math.exp %77 : vector<2x128xf32>
    %cst_37 = arith.constant 1.000000e+00 : f32
    %79 = vector.broadcast %cst_37 : f32 to vector<2x128xf32>
    %80 = arith.addf %79, %78 : vector<2x128xf32>
    %81 = arith.divf %79, %80 : vector<2x128xf32>
    %82 = math.tanh %76 : vector<2x128xf32>
    %83 = vector.extract_strided_slice %81 {offsets = [0, 0], sizes = [2, 32], strides = [1, 1]} : vector<2x128xf32> to vector<2x32xf32>
    %84 = vector.extract_strided_slice %81 {offsets = [0, 32], sizes = [2, 32], strides = [1, 1]} : vector<2x128xf32> to vector<2x32xf32>
    %85 = vector.extract_strided_slice %82 {offsets = [0, 64], sizes = [2, 32], strides = [1, 1]} : vector<2x128xf32> to vector<2x32xf32>
    %86 = vector.extract_strided_slice %81 {offsets = [0, 96], sizes = [2, 32], strides = [1, 1]} : vector<2x128xf32> to vector<2x32xf32>
    %87 = arith.mulf %84, %70 : vector<2x32xf32>
    %88 = arith.mulf %83, %85 : vector<2x32xf32>
    %89 = arith.addf %87, %88 : vector<2x32xf32>
    %90 = math.tanh %89 : vector<2x32xf32>
    %91 = arith.mulf %86, %90 : vector<2x32xf32>
    %c6_38 = arith.constant 6 : index
    %c0_39 = arith.constant 0 : index
    %92 = vector.load %arg14[%c6_38, %c0_39] : memref<16x32xf32, #tpu.memory_space<vmem>>, vector<2x32xf32>
    tpu.vector_store %arg14[%c6_38, %c0_39], %91 {strides = array<i32>} : memref<16x32xf32, #tpu.memory_space<vmem>>, vector<2x32xf32>,
    %c8 = arith.constant 8 : index
    %c0_40 = arith.constant 0 : index
    %93 = vector.load %arg13[%c8, %c0_40] : memref<16x128xf32, #tpu.memory_space<vmem>>, vector<2x128xf32>
    %cst_41 = arith.constant dense<0.000000e+00> : vector<2x128xf32>
    %94 = tpu.matmul %91, %14, %cst_41 {dimension_numbers = #tpu.dot_dimension_numbers<[1], [0], [0], [1], [0, 0, 1, 1], [], []>} : vector<2x32xf32>, vector<32x128xf32>, vector<2x128xf32> -> vector<2x128xf32>
    %95 = arith.addf %93, %94 : vector<2x128xf32>
    %96 = arith.negf %95 : vector<2x128xf32>
    %97 = math.exp %96 : vector<2x128xf32>
    %cst_42 = arith.constant 1.000000e+00 : f32
    %98 = vector.broadcast %cst_42 : f32 to vector<2x128xf32>
    %99 = arith.addf %98, %97 : vector<2x128xf32>
    %100 = arith.divf %98, %99 : vector<2x128xf32>
    %101 = math.tanh %95 : vector<2x128xf32>
    %102 = vector.extract_strided_slice %100 {offsets = [0, 0], sizes = [2, 32], strides = [1, 1]} : vector<2x128xf32> to vector<2x32xf32>
    %103 = vector.extract_strided_slice %100 {offsets = [0, 32], sizes = [2, 32], strides = [1, 1]} : vector<2x128xf32> to vector<2x32xf32>
    %104 = vector.extract_strided_slice %101 {offsets = [0, 64], sizes = [2, 32], strides = [1, 1]} : vector<2x128xf32> to vector<2x32xf32>
    %105 = vector.extract_strided_slice %100 {offsets = [0, 96], sizes = [2, 32], strides = [1, 1]} : vector<2x128xf32> to vector<2x32xf32>
    %106 = arith.mulf %103, %89 : vector<2x32xf32>
    %107 = arith.mulf %102, %104 : vector<2x32xf32>
    %108 = arith.addf %106, %107 : vector<2x32xf32>
    %109 = math.tanh %108 : vector<2x32xf32>
    %110 = arith.mulf %105, %109 : vector<2x32xf32>
    %c8_43 = arith.constant 8 : index
    %c0_44 = arith.constant 0 : index
    %111 = vector.load %arg14[%c8_43, %c0_44] : memref<16x32xf32, #tpu.memory_space<vmem>>, vector<2x32xf32>
    tpu.vector_store %arg14[%c8_43, %c0_44], %110 {strides = array<i32>} : memref<16x32xf32, #tpu.memory_space<vmem>>, vector<2x32xf32>,
    %c10 = arith.constant 10 : index
    %c0_45 = arith.constant 0 : index
    %112 = vector.load %arg13[%c10, %c0_45] : memref<16x128xf32, #tpu.memory_space<vmem>>, vector<2x128xf32>
    %cst_46 = arith.constant dense<0.000000e+00> : vector<2x128xf32>
    %113 = tpu.matmul %110, %14, %cst_46 {dimension_numbers = #tpu.dot_dimension_numbers<[1], [0], [0], [1], [0, 0, 1, 1], [], []>} : vector<2x32xf32>, vector<32x128xf32>, vector<2x128xf32> -> vector<2x128xf32>
    %114 = arith.addf %112, %113 : vector<2x128xf32>
    %115 = arith.negf %114 : vector<2x128xf32>
    %116 = math.exp %115 : vector<2x128xf32>
    %cst_47 = arith.constant 1.000000e+00 : f32
    %117 = vector.broadcast %cst_47 : f32 to vector<2x128xf32>
    %118 = arith.addf %117, %116 : vector<2x128xf32>
    %119 = arith.divf %117, %118 : vector<2x128xf32>
    %120 = math.tanh %114 : vector<2x128xf32>
    %121 = vector.extract_strided_slice %119 {offsets = [0, 0], sizes = [2, 32], strides = [1, 1]} : vector<2x128xf32> to vector<2x32xf32>
    %122 = vector.extract_strided_slice %119 {offsets = [0, 32], sizes = [2, 32], strides = [1, 1]} : vector<2x128xf32> to vector<2x32xf32>
    %123 = vector.extract_strided_slice %120 {offsets = [0, 64], sizes = [2, 32], strides = [1, 1]} : vector<2x128xf32> to vector<2x32xf32>
    %124 = vector.extract_strided_slice %119 {offsets = [0, 96], sizes = [2, 32], strides = [1, 1]} : vector<2x128xf32> to vector<2x32xf32>
    %125 = arith.mulf %122, %108 : vector<2x32xf32>
    %126 = arith.mulf %121, %123 : vector<2x32xf32>
    %127 = arith.addf %125, %126 : vector<2x32xf32>
    %128 = math.tanh %127 : vector<2x32xf32>
    %129 = arith.mulf %124, %128 : vector<2x32xf32>
    %c10_48 = arith.constant 10 : index
    %c0_49 = arith.constant 0 : index
    %130 = vector.load %arg14[%c10_48, %c0_49] : memref<16x32xf32, #tpu.memory_space<vmem>>, vector<2x32xf32>
    tpu.vector_store %arg14[%c10_48, %c0_49], %129 {strides = array<i32>} : memref<16x32xf32, #tpu.memory_space<vmem>>, vector<2x32xf32>,
    %c12 = arith.constant 12 : index
    %c0_50 = arith.constant 0 : index
    %131 = vector.load %arg13[%c12, %c0_50] : memref<16x128xf32, #tpu.memory_space<vmem>>, vector<2x128xf32>
    %cst_51 = arith.constant dense<0.000000e+00> : vector<2x128xf32>
    %132 = tpu.matmul %129, %14, %cst_51 {dimension_numbers = #tpu.dot_dimension_numbers<[1], [0], [0], [1], [0, 0, 1, 1], [], []>} : vector<2x32xf32>, vector<32x128xf32>, vector<2x128xf32> -> vector<2x128xf32>
    %133 = arith.addf %131, %132 : vector<2x128xf32>
    %134 = arith.negf %133 : vector<2x128xf32>
    %135 = math.exp %134 : vector<2x128xf32>
    %cst_52 = arith.constant 1.000000e+00 : f32
    %136 = vector.broadcast %cst_52 : f32 to vector<2x128xf32>
    %137 = arith.addf %136, %135 : vector<2x128xf32>
    %138 = arith.divf %136, %137 : vector<2x128xf32>
    %139 = math.tanh %133 : vector<2x128xf32>
    %140 = vector.extract_strided_slice %138 {offsets = [0, 0], sizes = [2, 32], strides = [1, 1]} : vector<2x128xf32> to vector<2x32xf32>
    %141 = vector.extract_strided_slice %138 {offsets = [0, 32], sizes = [2, 32], strides = [1, 1]} : vector<2x128xf32> to vector<2x32xf32>
    %142 = vector.extract_strided_slice %139 {offsets = [0, 64], sizes = [2, 32], strides = [1, 1]} : vector<2x128xf32> to vector<2x32xf32>
    %143 = vector.extract_strided_slice %138 {offsets = [0, 96], sizes = [2, 32], strides = [1, 1]} : vector<2x128xf32> to vector<2x32xf32>
    %144 = arith.mulf %141, %127 : vector<2x32xf32>
    %145 = arith.mulf %140, %142 : vector<2x32xf32>
    %146 = arith.addf %144, %145 : vector<2x32xf32>
    %147 = math.tanh %146 : vector<2x32xf32>
    %148 = arith.mulf %143, %147 : vector<2x32xf32>
    %c12_53 = arith.constant 12 : index
    %c0_54 = arith.constant 0 : index
    %149 = vector.load %arg14[%c12_53, %c0_54] : memref<16x32xf32, #tpu.memory_space<vmem>>, vector<2x32xf32>
    tpu.vector_store %arg14[%c12_53, %c0_54], %148 {strides = array<i32>} : memref<16x32xf32, #tpu.memory_space<vmem>>, vector<2x32xf32>,
    %c14 = arith.constant 14 : index
    %c0_55 = arith.constant 0 : index
    %150 = vector.load %arg13[%c14, %c0_55] : memref<16x128xf32, #tpu.memory_space<vmem>>, vector<2x128xf32>
    %cst_56 = arith.constant dense<0.000000e+00> : vector<2x128xf32>
    %151 = tpu.matmul %148, %14, %cst_56 {dimension_numbers = #tpu.dot_dimension_numbers<[1], [0], [0], [1], [0, 0, 1, 1], [], []>} : vector<2x32xf32>, vector<32x128xf32>, vector<2x128xf32> -> vector<2x128xf32>
    %152 = arith.addf %150, %151 : vector<2x128xf32>
    %153 = arith.negf %152 : vector<2x128xf32>
    %154 = math.exp %153 : vector<2x128xf32>
    %cst_57 = arith.constant 1.000000e+00 : f32
    %155 = vector.broadcast %cst_57 : f32 to vector<2x128xf32>
    %156 = arith.addf %155, %154 : vector<2x128xf32>
    %157 = arith.divf %155, %156 : vector<2x128xf32>
    %158 = math.tanh %152 : vector<2x128xf32>
    %159 = vector.extract_strided_slice %157 {offsets = [0, 0], sizes = [2, 32], strides = [1, 1]} : vector<2x128xf32> to vector<2x32xf32>
    %160 = vector.extract_strided_slice %157 {offsets = [0, 32], sizes = [2, 32], strides = [1, 1]} : vector<2x128xf32> to vector<2x32xf32>
    %161 = vector.extract_strided_slice %158 {offsets = [0, 64], sizes = [2, 32], strides = [1, 1]} : vector<2x128xf32> to vector<2x32xf32>
    %162 = vector.extract_strided_slice %157 {offsets = [0, 96], sizes = [2, 32], strides = [1, 1]} : vector<2x128xf32> to vector<2x32xf32>
    %163 = arith.mulf %160, %146 : vector<2x32xf32>
    %164 = arith.mulf %159, %161 : vector<2x32xf32>
    %165 = arith.addf %163, %164 : vector<2x32xf32>
    %166 = math.tanh %165 : vector<2x32xf32>
    %167 = arith.mulf %162, %166 : vector<2x32xf32>
    %c14_58 = arith.constant 14 : index
    %c0_59 = arith.constant 0 : index
    %168 = vector.load %arg14[%c14_58, %c0_59] : memref<16x32xf32, #tpu.memory_space<vmem>>, vector<2x32xf32>
    tpu.vector_store %arg14[%c14_58, %c0_59], %167 {strides = array<i32>} : memref<16x32xf32, #tpu.memory_space<vmem>>, vector<2x32xf32>,
    %c0_60 = arith.constant 0 : index
    %c0_61 = arith.constant 0 : index
    %169 = vector.load %arg11[%c0_60, %c0_61] : memref<2x32xf32, #tpu.memory_space<vmem>>, vector<2x32xf32>
    tpu.vector_store %arg11[%c0_60, %c0_61], %167 {strides = array<i32>} : memref<2x32xf32, #tpu.memory_space<vmem>>, vector<2x32xf32>,
    %c0_62 = arith.constant 0 : index
    %c0_63 = arith.constant 0 : index
    %170 = vector.load %arg12[%c0_62, %c0_63] : memref<2x32xf32, #tpu.memory_space<vmem>>, vector<2x32xf32>
    tpu.vector_store %arg12[%c0_62, %c0_63], %165 {strides = array<i32>} : memref<2x32xf32, #tpu.memory_space<vmem>>, vector<2x32xf32>,
    %c0_64 = arith.constant 0 : index
    %c0_65 = arith.constant 0 : index
    %171 = vector.load %arg14[%c0_64, %c0_65] : memref<16x32xf32, #tpu.memory_space<vmem>>, vector<16x32xf32>
    %c0_66 = arith.constant 0 : index
    %c0_67 = arith.constant 0 : index
    %172 = vector.load %arg8[%c0_66, %c0_67] : memref<32x4xf32, #tpu.memory_space<vmem>>, vector<32x4xf32>
    %cst_68 = arith.constant dense<0.000000e+00> : vector<16x4xf32>
    %173 = tpu.matmul %171, %172, %cst_68 {dimension_numbers = #tpu.dot_dimension_numbers<[1], [0], [0], [1], [0, 0, 1, 1], [], []>} : vector<16x32xf32>, vector<32x4xf32>, vector<16x4xf32> -> vector<16x4xf32>
    %c0_69 = arith.constant 0 : index
    %c0_70 = arith.constant 0 : index
    %174 = vector.load %arg9[%c0_69, %c0_70] : memref<1x4xf32, #tpu.memory_space<vmem>>, vector<1x4xf32>
    %175 = vector.broadcast %174 : vector<1x4xf32> to vector<16x4xf32>
    %176 = arith.addf %173, %175 : vector<16x4xf32>
    %cst_71 = arith.constant dense<0xFF800000> : vector<16xf32>
    %177 = vector.multi_reduction <maximumf>, %176, %cst_71 [1] : vector<16x4xf32> to vector<16xf32>
    %178 = vector.shape_cast %177 : vector<16xf32> to vector<16x1xf32>
    %179 = vector.broadcast %178 : vector<16x1xf32> to vector<16x4xf32>
    %180 = arith.subf %176, %179 : vector<16x4xf32>
    %181 = math.exp %180 : vector<16x4xf32>
    %cst_72 = arith.constant dense<0.000000e+00> : vector<16xf32>
    %182 = vector.multi_reduction <add>, %181, %cst_72 [1] : vector<16x4xf32> to vector<16xf32>
    %183 = vector.shape_cast %182 : vector<16xf32> to vector<16x1xf32>
    %184 = tpu.reciprocal %183 : vector<16x1xf32> -> vector<16x1xf32>
    %185 = vector.broadcast %184 : vector<16x1xf32> to vector<16x4xf32>
    %186 = arith.mulf %181, %185 : vector<16x4xf32>
    %c0_73 = arith.constant 0 : index
    %c0_74 = arith.constant 0 : index
    %187 = vector.load %arg10[%c0_73, %c0_74] : memref<16x4xf32, #tpu.memory_space<vmem>>, vector<16x4xf32>
    tpu.vector_store %arg10[%c0_73, %c0_74], %186 {strides = array<i32>} : memref<16x4xf32, #tpu.memory_space<vmem>>, vector<16x4xf32>,
    return
  }
}

</mosaic_0001>

<llo_original>
// kernel: tpu_custom_call.1
$region0: #{tpu_custom_call.1}
  #allocation0 [shape = 'u32[]', space=smem, size = 0x4, offset = 0x4, fixed_abs, tag = 'smem constant byte address 0x4 - core index']
  #allocation1 [shape = 'u32[144,128]{1,0:T(1,128)}', space=vmem, size = 0x12000, scoped, tag = 'internal scratch']
  #allocation2 [shape = 'f32[16,128]{1,0:T(8,128)}', space=vmem, size = 0x2000, scoped, tag = 'scratch operand']
  #allocation3 [shape = 'f32[16,32]{1,0:T(8,128)}', space=vmem, size = 0x2000, scoped, tag = 'scratch operand']
  %s0 = inlined_call_operand.hbm [shape: f32[16,32], index: 0, kind: input, shape index: {}]
  %s1 = inlined_call_operand.vmem [shape: f32[2,32], index: 1, kind: input, shape index: {}]
  %s2 = inlined_call_operand.vmem [shape: f32[2,32], index: 2, kind: input, shape index: {}]
  %s3 = inlined_call_operand.vmem [shape: f32[32,32], index: 3, kind: input, shape index: {}]
  %s4 = inlined_call_operand.vmem [shape: f32[1,32], index: 4, kind: input, shape index: {}]
  %s5 = inlined_call_operand.hbm [shape: f32[32,128], index: 5, kind: input, shape index: {}]
  %s6 = inlined_call_operand.hbm [shape: f32[32,128], index: 6, kind: input, shape index: {}]
  %s7 = inlined_call_operand.vmem [shape: f32[1,128], index: 7, kind: input, shape index: {}]
  %s8 = inlined_call_operand.vmem [shape: f32[32,4], index: 8, kind: input, shape index: {}]
  %s9 = inlined_call_operand.vmem [shape: f32[1,4], index: 9, kind: input, shape index: {}]
  %s10 = inlined_call_operand.vmem [shape: f32[16,4], index: 10, kind: output, shape index: {0}]
  %s11 = inlined_call_operand.hbm [shape: f32[2,32], index: 11, kind: output, shape index: {1}]
  %s12 = inlined_call_operand.hbm [shape: f32[2,32], index: 12, kind: output, shape index: {2}]
  %13 = xla_tuple %s10, %s11, %s12
  %s14 = sld [smem:[#allocation0]]
  $region78: #{tpu_custom_call.1} parent=0
    _
  %s16 = ssub.s32 1, %s14
  %s17 = scalar_select 0, %s16, %s14
  $region1: #{tpu_custom_call.1} parent=0
    #allocation4 [shape = 'u8[8192]{0}', space=vmem, size = 0x2000, scoped, tag = 'input window, operand 0, single buffered']
    #allocation5 [shape = 's32[1]{0}', space=sflag, size = 0x4, scoped, tag = 'scoped memory for tpu_custom_call.1']
    #allocation6 [shape = 's32[1]{0}', space=sflag, size = 0x4, scoped, tag = 'scoped memory for tpu_custom_call.1']
    #allocation7 [shape = 'u8[16384]{0}', space=vmem, size = 0x4000, scoped, tag = 'input window, operand 5, single buffered']
    #allocation8 [shape = 's32[1]{0}', space=sflag, size = 0x4, scoped, tag = 'scoped memory for tpu_custom_call.1']
    #allocation9 [shape = 'u8[16384]{0}', space=vmem, size = 0x4000, scoped, tag = 'input window, operand 6, single buffered']
    #allocation10 [shape = 'u8[1024]{0}', space=vmem, size = 0x400, scoped, tag = 'output window, operand 1, single buffered']
    #allocation11 [shape = 'u8[1024]{0}', space=vmem, size = 0x400, scoped, tag = 'output window, operand 2, single buffered']
    #allocation12 [shape = 's32[1]{0}', space=sflag, size = 0x4, scoped, tag = 'scoped memory for tpu_custom_call.1']
    %18 = vsyncpa [#allocation5], 0
    %19 = vsyncpa [#allocation8], 0
    %20 = vsyncpa [#allocation6], 0
    %21 = vsyncpa [#allocation12], 0
    // Predicated region
    $region2: #{tpu_custom_call.1} parent=1 // pred_check
      _
    $region3: #{tpu_custom_call.1} parent=1 // pred_check_branch
      %23 = sbr.rel (0) target = $region5
    $region4: #{tpu_custom_call.1} parent=1 // pred_region
      %s25 = ssub.s32 256, 256
      %26 = vsyncadd [#allocation5], %s25
      %s27 = sshll.u32 [#allocation4], 4
      %s28 = int_to_ptr.vmem [resolvable:$true] %s27
      %33 = dma.hbm_to_vmem [thread:$0]  %s0, 256, %s28, [#allocation5], 128, 128, 8
    $region5: #{tpu_custom_call.1} parent=1 // pred_fallthru
      _
    // Predicated region
    $region6: #{tpu_custom_call.1} parent=1 // pred_check
      _
    $region7: #{tpu_custom_call.1} parent=1 // pred_check_branch
      %35 = sbr.rel (0) target = $region9
    $region8: #{tpu_custom_call.1} parent=1 // pred_region
      _
    $region9: #{tpu_custom_call.1} parent=1 // pred_fallthru
      _
    // Predicated region
    $region10: #{tpu_custom_call.1} parent=1 // pred_check
      _
    $region11: #{tpu_custom_call.1} parent=1 // pred_check_branch
      %37 = sbr.rel (0) target = $region13
    $region12: #{tpu_custom_call.1} parent=1 // pred_region
      _
    $region13: #{tpu_custom_call.1} parent=1 // pred_fallthru
      _
    // Predicated region
    $region14: #{tpu_custom_call.1} parent=1 // pred_check
      _
    $region15: #{tpu_custom_call.1} parent=1 // pred_check_branch
      %39 = sbr.rel (0) target = $region17
    $region16: #{tpu_custom_call.1} parent=1 // pred_region
      _
    $region17: #{tpu_custom_call.1} parent=1 // pred_fallthru
      _
    // Predicated region
    $region18: #{tpu_custom_call.1} parent=1 // pred_check
      _
    $region19: #{tpu_custom_call.1} parent=1 // pred_check_branch
      %41 = sbr.rel (0) target = $region21
    $region20: #{tpu_custom_call.1} parent=1 // pred_region
      _
    $region21: #{tpu_custom_call.1} parent=1 // pred_fallthru
      _
    // Predicated region
    $region22: #{tpu_custom_call.1} parent=1 // pred_check
      _
    $region23: #{tpu_custom_call.1} parent=1 // pred_check_branch
      %43 = sbr.rel (0) target = $region25
    $region24: #{tpu_custom_call.1} parent=1 // pred_region
      %s45 = ssub.s32 512, 512
      %46 = vsyncadd [#allocation8], %s45
      %s47 = sshll.u32 [#allocation7], 4
      %s48 = int_to_ptr.vmem [resolvable:$true] %s47
      %53 = dma.hbm_to_vmem [thread:$0]  %s5, 512, %s48, [#allocation8], 128, 128, 8
    $region25: #{tpu_custom_call.1} parent=1 // pred_fallthru
      _
    // Predicated region
    $region26: #{tpu_custom_call.1} parent=1 // pred_check
      _
    $region27: #{tpu_custom_call.1} parent=1 // pred_check_branch
      %55 = sbr.rel (0) target = $region29
    $region28: #{tpu_custom_call.1} parent=1 // pred_region
      %s57 = ssub.s32 512, 512
      %58 = vsyncadd [#allocation8], %s57
      %s59 = sshll.u32 [#allocation9], 4
      %s60 = int_to_ptr.vmem [resolvable:$true] %s59
      %65 = dma.hbm_to_vmem [thread:$0]  %s6, 512, %s60, [#allocation8], 128, 128, 8
    $region29: #{tpu_custom_call.1} parent=1 // pred_fallthru
      _
    // Predicated region
    $region30: #{tpu_custom_call.1} parent=1 // pred_check
      _
    $region31: #{tpu_custom_call.1} parent=1 // pred_check_branch
      %67 = sbr.rel (0) target = $region33
    $region32: #{tpu_custom_call.1} parent=1 // pred_region
      _
    $region33: #{tpu_custom_call.1} parent=1 // pred_fallthru
      _
    // Predicated region
    $region34: #{tpu_custom_call.1} parent=1 // pred_check
      _
    $region35: #{tpu_custom_call.1} parent=1 // pred_check_branch
      %69 = sbr.rel (0) target = $region37
    $region36: #{tpu_custom_call.1} parent=1 // pred_region
      _
    $region37: #{tpu_custom_call.1} parent=1 // pred_fallthru
      _
    // Predicated region
    $region38: #{tpu_custom_call.1} parent=1 // pred_check
      _
    $region39: #{tpu_custom_call.1} parent=1 // pred_check_branch
      %71 = sbr.rel (0) target = $region41
    $region40: #{tpu_custom_call.1} parent=1 // pred_region
      _
    $region41: #{tpu_custom_call.1} parent=1 // pred_fallthru
      _
    // Predicated region
    $region42: #{tpu_custom_call.1} parent=1 // pred_check
      _
    $region43: #{tpu_custom_call.1} parent=1 // pred_check_branch
      %73 = sbr.rel (0) target = $region45
    $region44: #{tpu_custom_call.1} parent=1 // pred_region
      %74 = dma.done [#allocation5], 256
    $region45: #{tpu_custom_call.1} parent=1 // pred_fallthru
      _
    // Predicated region
    $region46: #{tpu_custom_call.1} parent=1 // pred_check
      _
    $region47: #{tpu_custom_call.1} parent=1 // pred_check_branch
      %76 = sbr.rel (0) target = $region49
    $region48: #{tpu_custom_call.1} parent=1 // pred_region
      %77 = dma.done [#allocation8], 512
    $region49: #{tpu_custom_call.1} parent=1 // pred_fallthru
      _
    // Predicated region
    $region50: #{tpu_custom_call.1} parent=1 // pred_check
      _
    $region51: #{tpu_custom_call.1} parent=1 // pred_check_branch
      %79 = sbr.rel (0) target = $region53
    $region52: #{tpu_custom_call.1} parent=1 // pred_region
      %80 = dma.done [#allocation8], 512
    $region53: #{tpu_custom_call.1} parent=1 // pred_fallthru
      _
    %v81 = vld [vmem:[#allocation4] sm:$0xff]
    %v82 = vld [vmem:[#allocation4 + $0x8] sm:$0xff]
    %v83 = vld [vmem:[%s3] sm:$0xff]
    %v84 = vld [vmem:[%s3 + $0x8] sm:$0xff]
    %v85 = vld [vmem:[%s3 + $0x10] sm:$0xff]
    %v86 = vld [vmem:[%s3 + $0x18] sm:$0xff]
    %v87 = vld [vmem:[%s4] sm:$0x1]
    %v89 = vlaneseq
    %v90 = vshrl.u32 %v89, 7
    %v91 = vsub.s32 0, %v90
    %v92 = vrot.slane %v87, %v91
    %vm94 = vcmask 261120
    %v96 = vsel %vm94, %v81, 0
    %v99 = vsel %vm94, %v82, 0
    %101 = vmatprep.subr.mxu0 0.0
    %102 = vmatpush1.msra.mxu0 0.0
    %103 = vmatprep.subr.mxu0 0.0
    %104 = vmatpush1.msra.mxu0 0.0
    %105 = vmatprep.subr.mxu0 0.0
    %106 = vmatpush1.msra.mxu0 0.0
    %107 = vmatprep.subr.mxu0 0.0
    %108 = vmatpush1.msra.mxu0 0.0
    %109 = vmatprep.subr.mxu0 0.0
    %110 = vmatpush1.msra.mxu0 0.0
    %111 = vmatprep.subr.mxu0 0.0
    %112 = vmatpush1.msra.mxu0 0.0
    %113 = vmatprep.subr.mxu0 0.0
    %114 = vmatpush1.msra.mxu0 0.0
    %115 = vmatprep.subr.mxu0 0.0
    %116 = vmatpush1.msra.mxu0 0.0
    %117 = vmatprep.subr.mxu0 0.0
    %118 = vmatpush1.msra.mxu0 0.0
    %119 = vmatprep.subr.mxu0 0.0
    %120 = vmatpush1.msra.mxu0 0.0
    %121 = vmatprep.subr.mxu0 0.0
    %122 = vmatpush1.msra.mxu0 0.0
    %123 = vmatprep.subr.mxu0 0.0
    %124 = vmatpush1.msra.mxu0 0.0
    %125 = vmatprep.subr.mxu0 0.0
    %126 = vmatpush1.msra.mxu0 %v86
    %127 = vmatprep.subr.mxu0 0.0
    %128 = vmatpush1.msra.mxu0 %v85
    %129 = vmatprep.subr.mxu0 0.0
    %130 = vmatpush1.msra.mxu0 %v84
    %131 = vmatprep.subr.mxu0 0.0
    %132 = vmatpush1.msra.mxu0 %v83
    %133 = vmatprep.subr.mxu0 0.0
    %134 = vmatpush2.msra.mxu0 0.0
    %135 = vmatprep.subr.mxu0 0.0
    %136 = vmatpush2.msra.mxu0 0.0
    %137 = vmatprep.subr.mxu0 0.0
    %138 = vmatpush2.msra.mxu0 0.0
    %139 = vmatprep.subr.mxu0 0.0
    %140 = vmatpush2.msra.mxu0 0.0
    %141 = vmatprep.subr.mxu0 0.0
    %142 = vmatpush2.msra.mxu0 0.0
    %143 = vmatprep.subr.mxu0 0.0
    %144 = vmatpush2.msra.mxu0 0.0
    %145 = vmatprep.subr.mxu0 0.0
    %146 = vmatpush2.msra.mxu0 0.0
    %147 = vmatprep.subr.mxu0 0.0
    %148 = vmatpush2.msra.mxu0 0.0
    %149 = vmatprep.subr.mxu0 0.0
    %150 = vmatpush2.msra.mxu0 0.0
    %151 = vmatprep.subr.mxu0 0.0
    %152 = vmatpush2.msra.mxu0 0.0
    %153 = vmatprep.subr.mxu0 0.0
    %154 = vmatpush2.msra.mxu0 0.0
    %155 = vmatprep.subr.mxu0 0.0
    %156 = vmatpush2.msra.mxu0 0.0
    %157 = vmatprep.subr.mxu0 0.0
    %158 = vmatpush2.msra.mxu0 0.0
    %159 = vmatprep.subr.mxu0 0.0
    %160 = vmatpush2.msra.mxu0 0.0
    %161 = vmatprep.subr.mxu0 0.0
    %162 = vmatpush2.msra.mxu0 0.0
    %163 = vmatprep.subr.mxu0 0.0
    %164 = vmatpush2.msra.mxu0 0.0
    %165 = vmatprep.mubr.f32.mxu0 0.0
    %166 = vmatmul.mubr.f32.gmra.mxu0 %v96
    %v167 = vpop.f32.mrf.mxu0
    %v168 = vadd.f32 %v92, %v167
    %v169 = vpop.f32.mrf.mxu0
    %170 = vmatprep.mubr.f32.mxu0 0.0
    %171 = vmatmul.mubr.f32.gmra.mxu0 %v99
    %v172 = vpop.f32.mrf.mxu0
    %v173 = vadd.f32 %v92, %v172
    %v174 = vpop.f32.mrf.mxu0
    %175 = vdwg.mxu0
    %v176 = vmax.f32 %v168, 0.0
    %v177 = vmax.f32 %v173, 0.0
    %v178 = vld [vmem:[#allocation7] sm:$0xff]
    %v179 = vld [vmem:[#allocation7 + $0x8] sm:$0xff]
    %v180 = vld [vmem:[#allocation7 + $0x10] sm:$0xff]
    %v181 = vld [vmem:[#allocation7 + $0x18] sm:$0xff]
    %v182 = vld [vmem:[%s7] sm:$0x1]
    %v184 = vlaneseq
    %v185 = vshrl.u32 %v184, 7
    %v186 = vsub.s32 0, %v185
    %v187 = vrot.slane %v182, %v186
    %v190 = vsel %vm94, %v176, 0
    %v193 = vsel %vm94, %v177, 0
    %195 = vmatprep.subr.mxu0 0.0
    %196 = vmatpush1.msra.mxu0 0.0
    %197 = vmatprep.subr.mxu0 0.0
    %198 = vmatpush1.msra.mxu0 0.0
    %199 = vmatprep.subr.mxu0 0.0
    %200 = vmatpush1.msra.mxu0 0.0
    %201 = vmatprep.subr.mxu0 0.0
    %202 = vmatpush1.msra.mxu0 0.0
    %203 = vmatprep.subr.mxu0 0.0
    %204 = vmatpush1.msra.mxu0 0.0
    %205 = vmatprep.subr.mxu0 0.0
    %206 = vmatpush1.msra.mxu0 0.0
    %207 = vmatprep.subr.mxu0 0.0
    %208 = vmatpush1.msra.mxu0 0.0
    %209 = vmatprep.subr.mxu0 0.0
    %210 = vmatpush1.msra.mxu0 0.0
    %211 = vmatprep.subr.mxu0 0.0
    %212 = vmatpush1.msra.mxu0 0.0
    %213 = vmatprep.subr.mxu0 0.0
    %214 = vmatpush1.msra.mxu0 0.0
    %215 = vmatprep.subr.mxu0 0.0
    %216 = vmatpush1.msra.mxu0 0.0
    %217 = vmatprep.subr.mxu0 0.0
    %218 = vmatpush1.msra.mxu0 0.0
    %219 = vmatprep.subr.mxu0 0.0
    %220 = vmatpush1.msra.mxu0 %v181
    %221 = vmatprep.subr.mxu0 0.0
    %222 = vmatpush1.msra.mxu0 %v180
    %223 = vmatprep.subr.mxu0 0.0
    %224 = vmatpush1.msra.mxu0 %v179
    %225 = vmatprep.subr.mxu0 0.0
    %226 = vmatpush1.msra.mxu0 %v178
    %227 = vmatprep.subr.mxu0 0.0
    %228 = vmatpush2.msra.mxu0 0.0
    %229 = vmatprep.subr.mxu0 0.0
    %230 = vmatpush2.msra.mxu0 0.0
    %231 = vmatprep.subr.mxu0 0.0
    %232 = vmatpush2.msra.mxu0 0.0
    %233 = vmatprep.subr.mxu0 0.0
    %234 = vmatpush2.msra.mxu0 0.0
    %235 = vmatprep.subr.mxu0 0.0
    %236 = vmatpush2.msra.mxu0 0.0
    %237 = vmatprep.subr.mxu0 0.0
    %238 = vmatpush2.msra.mxu0 0.0
    %239 = vmatprep.subr.mxu0 0.0
    %240 = vmatpush2.msra.mxu0 0.0
    %241 = vmatprep.subr.mxu0 0.0
    %242 = vmatpush2.msra.mxu0 0.0
    %243 = vmatprep.subr.mxu0 0.0
    %244 = vmatpush2.msra.mxu0 0.0
    %245 = vmatprep.subr.mxu0 0.0
    %246 = vmatpush2.msra.mxu0 0.0
    %247 = vmatprep.subr.mxu0 0.0
    %248 = vmatpush2.msra.mxu0 0.0
    %249 = vmatprep.subr.mxu0 0.0
    %250 = vmatpush2.msra.mxu0 0.0
    %251 = vmatprep.subr.mxu0 0.0
    %252 = vmatpush2.msra.mxu0 0.0
    %253 = vmatprep.subr.mxu0 0.0
    %254 = vmatpush2.msra.mxu0 0.0
    %255 = vmatprep.subr.mxu0 0.0
    %256 = vmatpush2.msra.mxu0 0.0
    %257 = vmatprep.subr.mxu0 0.0
    %258 = vmatpush2.msra.mxu0 0.0
    %259 = vmatprep.mubr.f32.mxu0 0.0
    %260 = vmatmul.mubr.f32.gmra.mxu0 %v190
    %v261 = vpop.f32.mrf.mxu0
    %v262 = vadd.f32 %v187, %v261
    %v263 = vpop.f32.mrf.mxu0
    %264 = vmatprep.mubr.f32.mxu0 0.0
    %265 = vmatmul.mubr.f32.gmra.mxu0 %v193
    %v266 = vpop.f32.mrf.mxu0
    %v267 = vadd.f32 %v187, %v266
    %v268 = vpop.f32.mrf.mxu0
    %269 = vdwg.mxu0
    %270 = vst [vmem:[#allocation2] sm:$0xff] %v262
    %271 = vst [vmem:[#allocation2 + $0x8] sm:$0xff] %v267
    %v272 = vld [vmem:[#allocation9] sm:$0xff]
    %v273 = vld [vmem:[#allocation9 + $0x8] sm:$0xff]
    %v274 = vld [vmem:[#allocation9 + $0x10] sm:$0xff]
    %v275 = vld [vmem:[#allocation9 + $0x18] sm:$0xff]
    %v276 = vld [vmem:[%s1] sm:$0x3]
    %v277 = vld [vmem:[%s2] sm:$0x3]
    %v278 = vld [vmem:[#allocation2] sm:$0x3]
    %v280 = vsel %vm94, %v276, 0
    %282 = vmatprep.subr.mxu0 0.0
    %283 = vmatpush1.msra.mxu0 0.0
    %284 = vmatprep.subr.mxu0 0.0
    %285 = vmatpush1.msra.mxu0 0.0
    %286 = vmatprep.subr.mxu0 0.0
    %287 = vmatpush1.msra.mxu0 0.0
    %288 = vmatprep.subr.mxu0 0.0
    %289 = vmatpush1.msra.mxu0 0.0
    %290 = vmatprep.subr.mxu0 0.0
    %291 = vmatpush1.msra.mxu0 0.0
    %292 = vmatprep.subr.mxu0 0.0
    %293 = vmatpush1.msra.mxu0 0.0
    %294 = vmatprep.subr.mxu0 0.0
    %295 = vmatpush1.msra.mxu0 0.0
    %296 = vmatprep.subr.mxu0 0.0
    %297 = vmatpush1.msra.mxu0 0.0
    %298 = vmatprep.subr.mxu0 0.0
    %299 = vmatpush1.msra.mxu0 0.0
    %300 = vmatprep.subr.mxu0 0.0
    %301 = vmatpush1.msra.mxu0 0.0
    %302 = vmatprep.subr.mxu0 0.0
    %303 = vmatpush1.msra.mxu0 0.0
    %304 = vmatprep.subr.mxu0 0.0
    %305 = vmatpush1.msra.mxu0 0.0
    %306 = vmatprep.subr.mxu0 0.0
    %307 = vmatpush1.msra.mxu0 %v275
    %308 = vmatprep.subr.mxu0 0.0
    %309 = vmatpush1.msra.mxu0 %v274
    %310 = vmatprep.subr.mxu0 0.0
    %311 = vmatpush1.msra.mxu0 %v273
    %312 = vmatprep.subr.mxu0 0.0
    %313 = vmatpush1.msra.mxu0 %v272
    %314 = vmatprep.subr.mxu0 0.0
    %315 = vmatpush2.msra.mxu0 0.0
    %316 = vmatprep.subr.mxu0 0.0
    %317 = vmatpush2.msra.mxu0 0.0
    %318 = vmatprep.subr.mxu0 0.0
    %319 = vmatpush2.msra.mxu0 0.0
    %320 = vmatprep.subr.mxu0 0.0
    %321 = vmatpush2.msra.mxu0 0.0
    %322 = vmatprep.subr.mxu0 0.0
    %323 = vmatpush2.msra.mxu0 0.0
    %324 = vmatprep.subr.mxu0 0.0
    %325 = vmatpush2.msra.mxu0 0.0
    %326 = vmatprep.subr.mxu0 0.0
    %327 = vmatpush2.msra.mxu0 0.0
    %328 = vmatprep.subr.mxu0 0.0
    %329 = vmatpush2.msra.mxu0 0.0
    %330 = vmatprep.subr.mxu0 0.0
    %331 = vmatpush2.msra.mxu0 0.0
    %332 = vmatprep.subr.mxu0 0.0
    %333 = vmatpush2.msra.mxu0 0.0
    %334 = vmatprep.subr.mxu0 0.0
    %335 = vmatpush2.msra.mxu0 0.0
    %336 = vmatprep.subr.mxu0 0.0
    %337 = vmatpush2.msra.mxu0 0.0
    %338 = vmatprep.subr.mxu0 0.0
    %339 = vmatpush2.msra.mxu0 0.0
    %340 = vmatprep.subr.mxu0 0.0
    %341 = vmatpush2.msra.mxu0 0.0
    %342 = vmatprep.subr.mxu0 0.0
    %343 = vmatpush2.msra.mxu0 0.0
    %344 = vmatprep.subr.mxu0 0.0
    %345 = vmatpush2.msra.mxu0 0.0
    %346 = vmatprep.mubr.f32.mxu0 0.0
    %347 = vmatmul.mubr.f32.gmra.mxu0 %v280
    %v348 = vpop.f32.mrf.mxu0
    %v349 = vadd.f32 0.0, %v348
    %v350 = vpop.f32.mrf.mxu0
    %351 = vdwg.mxu0
    %v352 = vadd.f32 %v278, %v349
    %v353 = vxor.u32 %v352, 2147483648
    %v354 = vmul.f32 %v353, 1.442695
    %v355 = vpow.pop %v354
    %v356 = vadd.f32 %v355, 1.0
    %v357 = vrcp.pop %v356
    %v358 = vmul.f32 1.0, %v357
    %v359 = vtanh.pop %v352
    %361 = vrot.lane.b32.xlu0 %v277, 32
    %v362 = vpop.permute.xlu0 %361
    %v364 = vmul.f32 %v358, %v362
    %366 = vrot.lane.b32.xlu0 %v359, 64
    %v367 = vpop.permute.xlu0 %366
    %v369 = vmul.f32 %v358, %v367
    %371 = vrot.lane.b32.xlu0 %v369, 32
    %v372 = vpop.permute.xlu0 %371
    %v374 = vadd.f32 %v364, %v372
    %v375 = vtanh.pop %v374
    %377 = vrot.lane.b32.xlu0 %v375, 64
    %v378 = vpop.permute.xlu0 %377
    %v380 = vmul.f32 %v358, %v378
    %382 = vrot.lane.b32.xlu0 %v380, 32
    %v383 = vpop.permute.xlu0 %382
    %vm385 = vcmask 254976
    %386 = vst.msk [vmem:[#allocation3] sm:$0x3] %vm385, %v383
    %v387 = vld [vmem:[#allocation2 + $0x2] sm:$0x3]
    %v388 = vsel %vm94, %v383, 0
    %390 = vmatprep.subr.mxu0 0.0
    %391 = vmatpush1.msra.mxu0 0.0
    %392 = vmatprep.subr.mxu0 0.0
    %393 = vmatpush1.msra.mxu0 0.0
    %394 = vmatprep.subr.mxu0 0.0
    %395 = vmatpush1.msra.mxu0 0.0
    %396 = vmatprep.subr.mxu0 0.0
    %397 = vmatpush1.msra.mxu0 0.0
    %398 = vmatprep.subr.mxu0 0.0
    %399 = vmatpush1.msra.mxu0 0.0
    %400 = vmatprep.subr.mxu0 0.0
    %401 = vmatpush1.msra.mxu0 0.0
    %402 = vmatprep.subr.mxu0 0.0
    %403 = vmatpush1.msra.mxu0 0.0
    %404 = vmatprep.subr.mxu0 0.0
    %405 = vmatpush1.msra.mxu0 0.0
    %406 = vmatprep.subr.mxu0 0.0
    %407 = vmatpush1.msra.mxu0 0.0
    %408 = vmatprep.subr.mxu0 0.0
    %409 = vmatpush1.msra.mxu0 0.0
    %410 = vmatprep.subr.mxu0 0.0
    %411 = vmatpush1.msra.mxu0 0.0
    %412 = vmatprep.subr.mxu0 0.0
    %413 = vmatpush1.msra.mxu0 0.0
    %414 = vmatprep.subr.mxu0 0.0
    %415 = vmatpush1.msra.mxu0 %v275
    %416 = vmatprep.subr.mxu0 0.0
    %417 = vmatpush1.msra.mxu0 %v274
    %418 = vmatprep.subr.mxu0 0.0
    %419 = vmatpush1.msra.mxu0 %v273
    %420 = vmatprep.subr.mxu0 0.0
    %421 = vmatpush1.msra.mxu0 %v272
    %422 = vmatprep.subr.mxu0 0.0
    %423 = vmatpush2.msra.mxu0 0.0
    %424 = vmatprep.subr.mxu0 0.0
    %425 = vmatpush2.msra.mxu0 0.0
    %426 = vmatprep.subr.mxu0 0.0
    %427 = vmatpush2.msra.mxu0 0.0
    %428 = vmatprep.subr.mxu0 0.0
    %429 = vmatpush2.msra.mxu0 0.0
    %430 = vmatprep.subr.mxu0 0.0
    %431 = vmatpush2.msra.mxu0 0.0
    %432 = vmatprep.subr.mxu0 0.0
    %433 = vmatpush2.msra.mxu0 0.0
    %434 = vmatprep.subr.mxu0 0.0
    %435 = vmatpush2.msra.mxu0 0.0
    %436 = vmatprep.subr.mxu0 0.0
    %437 = vmatpush2.msra.mxu0 0.0
    %438 = vmatprep.subr.mxu0 0.0
    %439 = vmatpush2.msra.mxu0 0.0
    %440 = vmatprep.subr.mxu0 0.0
    %441 = vmatpush2.msra.mxu0 0.0
    %442 = vmatprep.subr.mxu0 0.0
    %443 = vmatpush2.msra.mxu0 0.0
    %444 = vmatprep.subr.mxu0 0.0
    %445 = vmatpush2.msra.mxu0 0.0
    %446 = vmatprep.subr.mxu0 0.0
    %447 = vmatpush2.msra.mxu0 0.0
    %448 = vmatprep.subr.mxu0 0.0
    %449 = vmatpush2.msra.mxu0 0.0
    %450 = vmatprep.subr.mxu0 0.0
    %451 = vmatpush2.msra.mxu0 0.0
    %452 = vmatprep.subr.mxu0 0.0
    %453 = vmatpush2.msra.mxu0 0.0
    %454 = vmatprep.mubr.f32.mxu0 0.0
    %455 = vmatmul.mubr.f32.gmra.mxu0 %v388
    %v456 = vpop.f32.mrf.mxu0
    %v457 = vadd.f32 0.0, %v456
    %v458 = vpop.f32.mrf.mxu0
    %459 = vdwg.mxu0
    %v460 = vadd.f32 %v387, %v457
    %v461 = vxor.u32 %v460, 2147483648
    %v462 = vmul.f32 %v461, 1.442695
    %v463 = vpow.pop %v462
    %v464 = vadd.f32 %v463, 1.0
    %v465 = vrcp.pop %v464
    %v466 = vmul.f32 1.0, %v465
    %v467 = vtanh.pop %v460
    %v468 = vmul.f32 %v466, %v374
    %470 = vrot.lane.b32.xlu0 %v467, 64
    %v471 = vpop.permute.xlu0 %470
    %v473 = vmul.f32 %v466, %v471
    %475 = vrot.lane.b32.xlu0 %v473, 32
    %v476 = vpop.permute.xlu0 %475
    %v478 = vadd.f32 %v468, %v476
    %v479 = vtanh.pop %v478
    %481 = vrot.lane.b32.xlu0 %v479, 64
    %v482 = vpop.permute.xlu0 %481
    %v484 = vmul.f32 %v466, %v482
    %486 = vrot.lane.b32.xlu0 %v484, 32
    %v487 = vpop.permute.xlu0 %486
    %489 = vst.msk [vmem:[#allocation3 + $0x2] sm:$0x3] %vm385, %v487
    %v490 = vld [vmem:[#allocation2 + $0x4] sm:$0x3]
    %v491 = vsel %vm94, %v487, 0
    %493 = vmatprep.subr.mxu0 0.0
    %494 = vmatpush1.msra.mxu0 0.0
    %495 = vmatprep.subr.mxu0 0.0
    %496 = vmatpush1.msra.mxu0 0.0
    %497 = vmatprep.subr.mxu0 0.0
    %498 = vmatpush1.msra.mxu0 0.0
    %499 = vmatprep.subr.mxu0 0.0
    %500 = vmatpush1.msra.mxu0 0.0
    %501 = vmatprep.subr.mxu0 0.0
    %502 = vmatpush1.msra.mxu0 0.0
    %503 = vmatprep.subr.mxu0 0.0
    %504 = vmatpush1.msra.mxu0 0.0
    %505 = vmatprep.subr.mxu0 0.0
    %506 = vmatpush1.msra.mxu0 0.0
    %507 = vmatprep.subr.mxu0 0.0
    %508 = vmatpush1.msra.mxu0 0.0
    %509 = vmatprep.subr.mxu0 0.0
    %510 = vmatpush1.msra.mxu0 0.0
    %511 = vmatprep.subr.mxu0 0.0
    %512 = vmatpush1.msra.mxu0 0.0
    %513 = vmatprep.subr.mxu0 0.0
    %514 = vmatpush1.msra.mxu0 0.0
    %515 = vmatprep.subr.mxu0 0.0
    %516 = vmatpush1.msra.mxu0 0.0
    %517 = vmatprep.subr.mxu0 0.0
    %518 = vmatpush1.msra.mxu0 %v275
    %519 = vmatprep.subr.mxu0 0.0
    %520 = vmatpush1.msra.mxu0 %v274
    %521 = vmatprep.subr.mxu0 0.0
    %522 = vmatpush1.msra.mxu0 %v273
    %523 = vmatprep.subr.mxu0 0.0
    %524 = vmatpush1.msra.mxu0 %v272
    %525 = vmatprep.subr.mxu0 0.0
    %526 = vmatpush2.msra.mxu0 0.0
    %527 = vmatprep.subr.mxu0 0.0
    %528 = vmatpush2.msra.mxu0 0.0
    %529 = vmatprep.subr.mxu0 0.0
    %530 = vmatpush2.msra.mxu0 0.0
    %531 = vmatprep.subr.mxu0 0.0
    %532 = vmatpush2.msra.mxu0 0.0
    %533 = vmatprep.subr.mxu0 0.0
    %534 = vmatpush2.msra.mxu0 0.0
    %535 = vmatprep.subr.mxu0 0.0
    %536 = vmatpush2.msra.mxu0 0.0
    %537 = vmatprep.subr.mxu0 0.0
    %538 = vmatpush2.msra.mxu0 0.0
    %539 = vmatprep.subr.mxu0 0.0
    %540 = vmatpush2.msra.mxu0 0.0
    %541 = vmatprep.subr.mxu0 0.0
    %542 = vmatpush2.msra.mxu0 0.0
    %543 = vmatprep.subr.mxu0 0.0
    %544 = vmatpush2.msra.mxu0 0.0
    %545 = vmatprep.subr.mxu0 0.0
    %546 = vmatpush2.msra.mxu0 0.0
    %547 = vmatprep.subr.mxu0 0.0
    %548 = vmatpush2.msra.mxu0 0.0
    %549 = vmatprep.subr.mxu0 0.0
    %550 = vmatpush2.msra.mxu0 0.0
    %551 = vmatprep.subr.mxu0 0.0
    %552 = vmatpush2.msra.mxu0 0.0
    %553 = vmatprep.subr.mxu0 0.0
    %554 = vmatpush2.msra.mxu0 0.0
    %555 = vmatprep.subr.mxu0 0.0
    %556 = vmatpush2.msra.mxu0 0.0
    %557 = vmatprep.mubr.f32.mxu0 0.0
    %558 = vmatmul.mubr.f32.gmra.mxu0 %v491
    %v559 = vpop.f32.mrf.mxu0
    %v560 = vadd.f32 0.0, %v559
    %v561 = vpop.f32.mrf.mxu0
    %562 = vdwg.mxu0
    %v563 = vadd.f32 %v490, %v560
    %v564 = vxor.u32 %v563, 2147483648
    %v565 = vmul.f32 %v564, 1.442695
    %v566 = vpow.pop %v565
    %v567 = vadd.f32 %v566, 1.0
    %v568 = vrcp.pop %v567
    %v569 = vmul.f32 1.0, %v568
    %v570 = vtanh.pop %v563
    %v571 = vmul.f32 %v569, %v478
    %573 = vrot.lane.b32.xlu0 %v570, 64
    %v574 = vpop.permute.xlu0 %573
    %v576 = vmul.f32 %v569, %v574
    %578 = vrot.lane.b32.xlu0 %v576, 32
    %v579 = vpop.permute.xlu0 %578
    %v581 = vadd.f32 %v571, %v579
    %v582 = vtanh.pop %v581
    %584 = vrot.lane.b32.xlu0 %v582, 64
    %v585 = vpop.permute.xlu0 %584
    %v587 = vmul.f32 %v569, %v585
    %589 = vrot.lane.b32.xlu0 %v587, 32
    %v590 = vpop.permute.xlu0 %589
    %592 = vst.msk [vmem:[#allocation3 + $0x4] sm:$0x3] %vm385, %v590
    %v593 = vld [vmem:[#allocation2 + $0x6] sm:$0x3]
    %v594 = vsel %vm94, %v590, 0
    %596 = vmatprep.subr.mxu0 0.0
    %597 = vmatpush1.msra.mxu0 0.0
    %598 = vmatprep.subr.mxu0 0.0
    %599 = vmatpush1.msra.mxu0 0.0
    %600 = vmatprep.subr.mxu0 0.0
    %601 = vmatpush1.msra.mxu0 0.0
    %602 = vmatprep.subr.mxu0 0.0
    %603 = vmatpush1.msra.mxu0 0.0
    %604 = vmatprep.subr.mxu0 0.0
    %605 = vmatpush1.msra.mxu0 0.0
    %606 = vmatprep.subr.mxu0 0.0
    %607 = vmatpush1.msra.mxu0 0.0
    %608 = vmatprep.subr.mxu0 0.0
    %609 = vmatpush1.msra.mxu0 0.0
    %610 = vmatprep.subr.mxu0 0.0
    %611 = vmatpush1.msra.mxu0 0.0
    %612 = vmatprep.subr.mxu0 0.0
    %613 = vmatpush1.msra.mxu0 0.0
    %614 = vmatprep.subr.mxu0 0.0
    %615 = vmatpush1.msra.mxu0 0.0
    %616 = vmatprep.subr.mxu0 0.0
    %617 = vmatpush1.msra.mxu0 0.0
    %618 = vmatprep.subr.mxu0 0.0
    %619 = vmatpush1.msra.mxu0 0.0
    %620 = vmatprep.subr.mxu0 0.0
    %621 = vmatpush1.msra.mxu0 %v275
    %622 = vmatprep.subr.mxu0 0.0
    %623 = vmatpush1.msra.mxu0 %v274
    %624 = vmatprep.subr.mxu0 0.0
    %625 = vmatpush1.msra.mxu0 %v273
    %626 = vmatprep.subr.mxu0 0.0
    %627 = vmatpush1.msra.mxu0 %v272
    %628 = vmatprep.subr.mxu0 0.0
    %629 = vmatpush2.msra.mxu0 0.0
    %630 = vmatprep.subr.mxu0 0.0
    %631 = vmatpush2.msra.mxu0 0.0
    %632 = vmatprep.subr.mxu0 0.0
    %633 = vmatpush2.msra.mxu0 0.0
    %634 = vmatprep.subr.mxu0 0.0
    %635 = vmatpush2.msra.mxu0 0.0
    %636 = vmatprep.subr.mxu0 0.0
    %637 = vmatpush2.msra.mxu0 0.0
    %638 = vmatprep.subr.mxu0 0.0
    %639 = vmatpush2.msra.mxu0 0.0
    %640 = vmatprep.subr.mxu0 0.0
    %641 = vmatpush2.msra.mxu0 0.0
    %642 = vmatprep.subr.mxu0 0.0
    %643 = vmatpush2.msra.mxu0 0.0
    %644 = vmatprep.subr.mxu0 0.0
    %645 = vmatpush2.msra.mxu0 0.0
    %646 = vmatprep.subr.mxu0 0.0
    %647 = vmatpush2.msra.mxu0 0.0
    %648 = vmatprep.subr.mxu0 0.0
    %649 = vmatpush2.msra.mxu0 0.0
    %650 = vmatprep.subr.mxu0 0.0
    %651 = vmatpush2.msra.mxu0 0.0
    %652 = vmatprep.subr.mxu0 0.0
    %653 = vmatpush2.msra.mxu0 0.0
    %654 = vmatprep.subr.mxu0 0.0
    %655 = vmatpush2.msra.mxu0 0.0
    %656 = vmatprep.subr.mxu0 0.0
    %657 = vmatpush2.msra.mxu0 0.0
    %658 = vmatprep.subr.mxu0 0.0
    %659 = vmatpush2.msra.mxu0 0.0
    %660 = vmatprep.mubr.f32.mxu0 0.0
    %661 = vmatmul.mubr.f32.gmra.mxu0 %v594
    %v662 = vpop.f32.mrf.mxu0
    %v663 = vadd.f32 0.0, %v662
    %v664 = vpop.f32.mrf.mxu0
    %665 = vdwg.mxu0
    %v666 = vadd.f32 %v593, %v663
    %v667 = vxor.u32 %v666, 2147483648
    %v668 = vmul.f32 %v667, 1.442695
    %v669 = vpow.pop %v668
    %v670 = vadd.f32 %v669, 1.0
    %v671 = vrcp.pop %v670
    %v672 = vmul.f32 1.0, %v671
    %v673 = vtanh.pop %v666
    %v674 = vmul.f32 %v672, %v581
    %676 = vrot.lane.b32.xlu0 %v673, 64
    %v677 = vpop.permute.xlu0 %676
    %v679 = vmul.f32 %v672, %v677
    %681 = vrot.lane.b32.xlu0 %v679, 32
    %v682 = vpop.permute.xlu0 %681
    %v684 = vadd.f32 %v674, %v682
    %v685 = vtanh.pop %v684
    %687 = vrot.lane.b32.xlu0 %v685, 64
    %v688 = vpop.permute.xlu0 %687
    %v690 = vmul.f32 %v672, %v688
    %692 = vrot.lane.b32.xlu0 %v690, 32
    %v693 = vpop.permute.xlu0 %692
    %695 = vst.msk [vmem:[#allocation3 + $0x6] sm:$0x3] %vm385, %v693
    %v696 = vld [vmem:[#allocation2 + $0x8] sm:$0x3]
    %v697 = vsel %vm94, %v693, 0
    %699 = vmatprep.subr.mxu0 0.0
    %700 = vmatpush1.msra.mxu0 0.0
    %701 = vmatprep.subr.mxu0 0.0
    %702 = vmatpush1.msra.mxu0 0.0
    %703 = vmatprep.subr.mxu0 0.0
    %704 = vmatpush1.msra.mxu0 0.0
    %705 = vmatprep.subr.mxu0 0.0
    %706 = vmatpush1.msra.mxu0 0.0
    %707 = vmatprep.subr.mxu0 0.0
    %708 = vmatpush1.msra.mxu0 0.0
    %709 = vmatprep.subr.mxu0 0.0
    %710 = vmatpush1.msra.mxu0 0.0
    %711 = vmatprep.subr.mxu0 0.0
    %712 = vmatpush1.msra.mxu0 0.0
    %713 = vmatprep.subr.mxu0 0.0
    %714 = vmatpush1.msra.mxu0 0.0
    %715 = vmatprep.subr.mxu0 0.0
    %716 = vmatpush1.msra.mxu0 0.0
    %717 = vmatprep.subr.mxu0 0.0
    %718 = vmatpush1.msra.mxu0 0.0
    %719 = vmatprep.subr.mxu0 0.0
    %720 = vmatpush1.msra.mxu0 0.0
    %721 = vmatprep.subr.mxu0 0.0
    %722 = vmatpush1.msra.mxu0 0.0
    %723 = vmatprep.subr.mxu0 0.0
    %724 = vmatpush1.msra.mxu0 %v275
    %725 = vmatprep.subr.mxu0 0.0
    %726 = vmatpush1.msra.mxu0 %v274
    %727 = vmatprep.subr.mxu0 0.0
    %728 = vmatpush1.msra.mxu0 %v273
    %729 = vmatprep.subr.mxu0 0.0
    %730 = vmatpush1.msra.mxu0 %v272
    %731 = vmatprep.subr.mxu0 0.0
    %732 = vmatpush2.msra.mxu0 0.0
    %733 = vmatprep.subr.mxu0 0.0
    %734 = vmatpush2.msra.mxu0 0.0
    %735 = vmatprep.subr.mxu0 0.0
    %736 = vmatpush2.msra.mxu0 0.0
    %737 = vmatprep.subr.mxu0 0.0
    %738 = vmatpush2.msra.mxu0 0.0
    %739 = vmatprep.subr.mxu0 0.0
    %740 = vmatpush2.msra.mxu0 0.0
    %741 = vmatprep.subr.mxu0 0.0
    %742 = vmatpush2.msra.mxu0 0.0
    %743 = vmatprep.subr.mxu0 0.0
    %744 = vmatpush2.msra.mxu0 0.0
    %745 = vmatprep.subr.mxu0 0.0
    %746 = vmatpush2.msra.mxu0 0.0
    %747 = vmatprep.subr.mxu0 0.0
    %748 = vmatpush2.msra.mxu0 0.0
    %749 = vmatprep.subr.mxu0 0.0
    %750 = vmatpush2.msra.mxu0 0.0
    %751 = vmatprep.subr.mxu0 0.0
    %752 = vmatpush2.msra.mxu0 0.0
    %753 = vmatprep.subr.mxu0 0.0
    %754 = vmatpush2.msra.mxu0 0.0
    %755 = vmatprep.subr.mxu0 0.0
    %756 = vmatpush2.msra.mxu0 0.0
    %757 = vmatprep.subr.mxu0 0.0
    %758 = vmatpush2.msra.mxu0 0.0
    %759 = vmatprep.subr.mxu0 0.0
    %760 = vmatpush2.msra.mxu0 0.0
    %761 = vmatprep.subr.mxu0 0.0
    %762 = vmatpush2.msra.mxu0 0.0
    %763 = vmatprep.mubr.f32.mxu0 0.0
    %764 = vmatmul.mubr.f32.gmra.mxu0 %v697
    %v765 = vpop.f32.mrf.mxu0
    %v766 = vadd.f32 0.0, %v765
    %v767 = vpop.f32.mrf.mxu0
    %768 = vdwg.mxu0
    %v769 = vadd.f32 %v696, %v766
    %v770 = vxor.u32 %v769, 2147483648
    %v771 = vmul.f32 %v770, 1.442695
    %v772 = vpow.pop %v771
    %v773 = vadd.f32 %v772, 1.0
    %v774 = vrcp.pop %v773
    %v775 = vmul.f32 1.0, %v774
    %v776 = vtanh.pop %v769
    %v777 = vmul.f32 %v775, %v684
    %779 = vrot.lane.b32.xlu0 %v776, 64
    %v780 = vpop.permute.xlu0 %779
    %v782 = vmul.f32 %v775, %v780
    %784 = vrot.lane.b32.xlu0 %v782, 32
    %v785 = vpop.permute.xlu0 %784
    %v787 = vadd.f32 %v777, %v785
    %v788 = vtanh.pop %v787
    %790 = vrot.lane.b32.xlu0 %v788, 64
    %v791 = vpop.permute.xlu0 %790
    %v793 = vmul.f32 %v775, %v791
    %795 = vrot.lane.b32.xlu0 %v793, 32
    %v796 = vpop.permute.xlu0 %795
    %798 = vst.msk [vmem:[#allocation3 + $0x8] sm:$0x3] %vm385, %v796
    %v799 = vld [vmem:[#allocation2 + $0xa] sm:$0x3]
    %v800 = vsel %vm94, %v796, 0
    %802 = vmatprep.subr.mxu0 0.0
    %803 = vmatpush1.msra.mxu0 0.0
    %804 = vmatprep.subr.mxu0 0.0
    %805 = vmatpush1.msra.mxu0 0.0
    %806 = vmatprep.subr.mxu0 0.0
    %807 = vmatpush1.msra.mxu0 0.0
    %808 = vmatprep.subr.mxu0 0.0
    %809 = vmatpush1.msra.mxu0 0.0
    %810 = vmatprep.subr.mxu0 0.0
    %811 = vmatpush1.msra.mxu0 0.0
    %812 = vmatprep.subr.mxu0 0.0
    %813 = vmatpush1.msra.mxu0 0.0
    %814 = vmatprep.subr.mxu0 0.0
    %815 = vmatpush1.msra.mxu0 0.0
    %816 = vmatprep.subr.mxu0 0.0
    %817 = vmatpush1.msra.mxu0 0.0
    %818 = vmatprep.subr.mxu0 0.0
    %819 = vmatpush1.msra.mxu0 0.0
    %820 = vmatprep.subr.mxu0 0.0
    %821 = vmatpush1.msra.mxu0 0.0
    %822 = vmatprep.subr.mxu0 0.0
    %823 = vmatpush1.msra.mxu0 0.0
    %824 = vmatprep.subr.mxu0 0.0
    %825 = vmatpush1.msra.mxu0 0.0
    %826 = vmatprep.subr.mxu0 0.0
    %827 = vmatpush1.msra.mxu0 %v275
    %828 = vmatprep.subr.mxu0 0.0
    %829 = vmatpush1.msra.mxu0 %v274
    %830 = vmatprep.subr.mxu0 0.0
    %831 = vmatpush1.msra.mxu0 %v273
    %832 = vmatprep.subr.mxu0 0.0
    %833 = vmatpush1.msra.mxu0 %v272
    %834 = vmatprep.subr.mxu0 0.0
    %835 = vmatpush2.msra.mxu0 0.0
    %836 = vmatprep.subr.mxu0 0.0
    %837 = vmatpush2.msra.mxu0 0.0
    %838 = vmatprep.subr.mxu0 0.0
    %839 = vmatpush2.msra.mxu0 0.0
    %840 = vmatprep.subr.mxu0 0.0
    %841 = vmatpush2.msra.mxu0 0.0
    %842 = vmatprep.subr.mxu0 0.0
    %843 = vmatpush2.msra.mxu0 0.0
    %844 = vmatprep.subr.mxu0 0.0
    %845 = vmatpush2.msra.mxu0 0.0
    %846 = vmatprep.subr.mxu0 0.0
    %847 = vmatpush2.msra.mxu0 0.0
    %848 = vmatprep.subr.mxu0 0.0
    %849 = vmatpush2.msra.mxu0 0.0
    %850 = vmatprep.subr.mxu0 0.0
    %851 = vmatpush2.msra.mxu0 0.0
    %852 = vmatprep.subr.mxu0 0.0
    %853 = vmatpush2.msra.mxu0 0.0
    %854 = vmatprep.subr.mxu0 0.0
    %855 = vmatpush2.msra.mxu0 0.0
    %856 = vmatprep.subr.mxu0 0.0
    %857 = vmatpush2.msra.mxu0 0.0
    %858 = vmatprep.subr.mxu0 0.0
    %859 = vmatpush2.msra.mxu0 0.0
    %860 = vmatprep.subr.mxu0 0.0
    %861 = vmatpush2.msra.mxu0 0.0
    %862 = vmatprep.subr.mxu0 0.0
    %863 = vmatpush2.msra.mxu0 0.0
    %864 = vmatprep.subr.mxu0 0.0
    %865 = vmatpush2.msra.mxu0 0.0
    %866 = vmatprep.mubr.f32.mxu0 0.0
    %867 = vmatmul.mubr.f32.gmra.mxu0 %v800
    %v868 = vpop.f32.mrf.mxu0
    %v869 = vadd.f32 0.0, %v868
    %v870 = vpop.f32.mrf.mxu0
    %871 = vdwg.mxu0
    %v872 = vadd.f32 %v799, %v869
    %v873 = vxor.u32 %v872, 2147483648
    %v874 = vmul.f32 %v873, 1.442695
    %v875 = vpow.pop %v874
    %v876 = vadd.f32 %v875, 1.0
    %v877 = vrcp.pop %v876
    %v878 = vmul.f32 1.0, %v877
    %v879 = vtanh.pop %v872
    %v880 = vmul.f32 %v878, %v787
    %882 = vrot.lane.b32.xlu0 %v879, 64
    %v883 = vpop.permute.xlu0 %882
    %v885 = vmul.f32 %v878, %v883
    %887 = vrot.lane.b32.xlu0 %v885, 32
    %v888 = vpop.permute.xlu0 %887
    %v890 = vadd.f32 %v880, %v888
    %v891 = vtanh.pop %v890
    %893 = vrot.lane.b32.xlu0 %v891, 64
    %v894 = vpop.permute.xlu0 %893
    %v896 = vmul.f32 %v878, %v894
    %898 = vrot.lane.b32.xlu0 %v896, 32
    %v899 = vpop.permute.xlu0 %898
    %901 = vst.msk [vmem:[#allocation3 + $0xa] sm:$0x3] %vm385, %v899
    %v902 = vld [vmem:[#allocation2 + $0xc] sm:$0x3]
    %v903 = vsel %vm94, %v899, 0
    %905 = vmatprep.subr.mxu0 0.0
    %906 = vmatpush1.msra.mxu0 0.0
    %907 = vmatprep.subr.mxu0 0.0
    %908 = vmatpush1.msra.mxu0 0.0
    %909 = vmatprep.subr.mxu0 0.0
    %910 = vmatpush1.msra.mxu0 0.0
    %911 = vmatprep.subr.mxu0 0.0
    %912 = vmatpush1.msra.mxu0 0.0
    %913 = vmatprep.subr.mxu0 0.0
    %914 = vmatpush1.msra.mxu0 0.0
    %915 = vmatprep.subr.mxu0 0.0
    %916 = vmatpush1.msra.mxu0 0.0
    %917 = vmatprep.subr.mxu0 0.0
    %918 = vmatpush1.msra.mxu0 0.0
    %919 = vmatprep.subr.mxu0 0.0
    %920 = vmatpush1.msra.mxu0 0.0
    %921 = vmatprep.subr.mxu0 0.0
    %922 = vmatpush1.msra.mxu0 0.0
    %923 = vmatprep.subr.mxu0 0.0
    %924 = vmatpush1.msra.mxu0 0.0
    %925 = vmatprep.subr.mxu0 0.0
    %926 = vmatpush1.msra.mxu0 0.0
    %927 = vmatprep.subr.mxu0 0.0
    %928 = vmatpush1.msra.mxu0 0.0
    %929 = vmatprep.subr.mxu0 0.0
    %930 = vmatpush1.msra.mxu0 %v275
    %931 = vmatprep.subr.mxu0 0.0
    %932 = vmatpush1.msra.mxu0 %v274
    %933 = vmatprep.subr.mxu0 0.0
    %934 = vmatpush1.msra.mxu0 %v273
    %935 = vmatprep.subr.mxu0 0.0
    %936 = vmatpush1.msra.mxu0 %v272
    %937 = vmatprep.subr.mxu0 0.0
    %938 = vmatpush2.msra.mxu0 0.0
    %939 = vmatprep.subr.mxu0 0.0
    %940 = vmatpush2.msra.mxu0 0.0
    %941 = vmatprep.subr.mxu0 0.0
    %942 = vmatpush2.msra.mxu0 0.0
    %943 = vmatprep.subr.mxu0 0.0
    %944 = vmatpush2.msra.mxu0 0.0
    %945 = vmatprep.subr.mxu0 0.0
    %946 = vmatpush2.msra.mxu0 0.0
    %947 = vmatprep.subr.mxu0 0.0
    %948 = vmatpush2.msra.mxu0 0.0
    %949 = vmatprep.subr.mxu0 0.0
    %950 = vmatpush2.msra.mxu0 0.0
    %951 = vmatprep.subr.mxu0 0.0
    %952 = vmatpush2.msra.mxu0 0.0
    %953 = vmatprep.subr.mxu0 0.0
    %954 = vmatpush2.msra.mxu0 0.0
    %955 = vmatprep.subr.mxu0 0.0
    %956 = vmatpush2.msra.mxu0 0.0
    %957 = vmatprep.subr.mxu0 0.0
    %958 = vmatpush2.msra.mxu0 0.0
    %959 = vmatprep.subr.mxu0 0.0
    %960 = vmatpush2.msra.mxu0 0.0
    %961 = vmatprep.subr.mxu0 0.0
    %962 = vmatpush2.msra.mxu0 0.0
    %963 = vmatprep.subr.mxu0 0.0
    %964 = vmatpush2.msra.mxu0 0.0
    %965 = vmatprep.subr.mxu0 0.0
    %966 = vmatpush2.msra.mxu0 0.0
    %967 = vmatprep.subr.mxu0 0.0
    %968 = vmatpush2.msra.mxu0 0.0
    %969 = vmatprep.mubr.f32.mxu0 0.0
    %970 = vmatmul.mubr.f32.gmra.mxu0 %v903
    %v971 = vpop.f32.mrf.mxu0
    %v972 = vadd.f32 0.0, %v971
    %v973 = vpop.f32.mrf.mxu0
    %974 = vdwg.mxu0
    %v975 = vadd.f32 %v902, %v972
    %v976 = vxor.u32 %v975, 2147483648
    %v977 = vmul.f32 %v976, 1.442695
    %v978 = vpow.pop %v977
    %v979 = vadd.f32 %v978, 1.0
    %v980 = vrcp.pop %v979
    %v981 = vmul.f32 1.0, %v980
    %v982 = vtanh.pop %v975
    %v983 = vmul.f32 %v981, %v890
    %985 = vrot.lane.b32.xlu0 %v982, 64
    %v986 = vpop.permute.xlu0 %985
    %v988 = vmul.f32 %v981, %v986
    %990 = vrot.lane.b32.xlu0 %v988, 32
    %v991 = vpop.permute.xlu0 %990
    %v993 = vadd.f32 %v983, %v991
    %v994 = vtanh.pop %v993
    %996 = vrot.lane.b32.xlu0 %v994, 64
    %v997 = vpop.permute.xlu0 %996
    %v999 = vmul.f32 %v981, %v997
    %1001 = vrot.lane.b32.xlu0 %v999, 32
    %v1002 = vpop.permute.xlu0 %1001
    %1004 = vst.msk [vmem:[#allocation3 + $0xc] sm:$0x3] %vm385, %v1002
    %v1005 = vld [vmem:[#allocation2 + $0xe] sm:$0x3]
    %v1006 = vsel %vm94, %v1002, 0
    %1008 = vmatprep.subr.mxu0 0.0
    %1009 = vmatpush1.msra.mxu0 0.0
    %1010 = vmatprep.subr.mxu0 0.0
    %1011 = vmatpush1.msra.mxu0 0.0
    %1012 = vmatprep.subr.mxu0 0.0
    %1013 = vmatpush1.msra.mxu0 0.0
    %1014 = vmatprep.subr.mxu0 0.0
    %1015 = vmatpush1.msra.mxu0 0.0
    %1016 = vmatprep.subr.mxu0 0.0
    %1017 = vmatpush1.msra.mxu0 0.0
    %1018 = vmatprep.subr.mxu0 0.0
    %1019 = vmatpush1.msra.mxu0 0.0
    %1020 = vmatprep.subr.mxu0 0.0
    %1021 = vmatpush1.msra.mxu0 0.0
    %1022 = vmatprep.subr.mxu0 0.0
    %1023 = vmatpush1.msra.mxu0 0.0
    %1024 = vmatprep.subr.mxu0 0.0
    %1025 = vmatpush1.msra.mxu0 0.0
    %1026 = vmatprep.subr.mxu0 0.0
    %1027 = vmatpush1.msra.mxu0 0.0
    %1028 = vmatprep.subr.mxu0 0.0
    %1029 = vmatpush1.msra.mxu0 0.0
    %1030 = vmatprep.subr.mxu0 0.0
    %1031 = vmatpush1.msra.mxu0 0.0
    %1032 = vmatprep.subr.mxu0 0.0
    %1033 = vmatpush1.msra.mxu0 %v275
    %1034 = vmatprep.subr.mxu0 0.0
    %1035 = vmatpush1.msra.mxu0 %v274
    %1036 = vmatprep.subr.mxu0 0.0
    %1037 = vmatpush1.msra.mxu0 %v273
    %1038 = vmatprep.subr.mxu0 0.0
    %1039 = vmatpush1.msra.mxu0 %v272
    %1040 = vmatprep.subr.mxu0 0.0
    %1041 = vmatpush2.msra.mxu0 0.0
    %1042 = vmatprep.subr.mxu0 0.0
    %1043 = vmatpush2.msra.mxu0 0.0
    %1044 = vmatprep.subr.mxu0 0.0
    %1045 = vmatpush2.msra.mxu0 0.0
    %1046 = vmatprep.subr.mxu0 0.0
    %1047 = vmatpush2.msra.mxu0 0.0
    %1048 = vmatprep.subr.mxu0 0.0
    %1049 = vmatpush2.msra.mxu0 0.0
    %1050 = vmatprep.subr.mxu0 0.0
    %1051 = vmatpush2.msra.mxu0 0.0
    %1052 = vmatprep.subr.mxu0 0.0
    %1053 = vmatpush2.msra.mxu0 0.0
    %1054 = vmatprep.subr.mxu0 0.0
    %1055 = vmatpush2.msra.mxu0 0.0
    %1056 = vmatprep.subr.mxu0 0.0
    %1057 = vmatpush2.msra.mxu0 0.0
    %1058 = vmatprep.subr.mxu0 0.0
    %1059 = vmatpush2.msra.mxu0 0.0
    %1060 = vmatprep.subr.mxu0 0.0
    %1061 = vmatpush2.msra.mxu0 0.0
    %1062 = vmatprep.subr.mxu0 0.0
    %1063 = vmatpush2.msra.mxu0 0.0
    %1064 = vmatprep.subr.mxu0 0.0
    %1065 = vmatpush2.msra.mxu0 0.0
    %1066 = vmatprep.subr.mxu0 0.0
    %1067 = vmatpush2.msra.mxu0 0.0
    %1068 = vmatprep.subr.mxu0 0.0
    %1069 = vmatpush2.msra.mxu0 0.0
    %1070 = vmatprep.subr.mxu0 0.0
    %1071 = vmatpush2.msra.mxu0 0.0
    %1072 = vmatprep.mubr.f32.mxu0 0.0
    %1073 = vmatmul.mubr.f32.gmra.mxu0 %v1006
    %v1074 = vpop.f32.mrf.mxu0
    %v1075 = vadd.f32 0.0, %v1074
    %v1076 = vpop.f32.mrf.mxu0
    %1077 = vdwg.mxu0
    %v1078 = vadd.f32 %v1005, %v1075
    %v1079 = vxor.u32 %v1078, 2147483648
    %v1080 = vmul.f32 %v1079, 1.442695
    %v1081 = vpow.pop %v1080
    %v1082 = vadd.f32 %v1081, 1.0
    %v1083 = vrcp.pop %v1082
    %v1084 = vmul.f32 1.0, %v1083
    %v1085 = vtanh.pop %v1078
    %v1086 = vmul.f32 %v1084, %v993
    %1088 = vrot.lane.b32.xlu0 %v1085, 64
    %v1089 = vpop.permute.xlu0 %1088
    %v1091 = vmul.f32 %v1084, %v1089
    %1093 = vrot.lane.b32.xlu0 %v1091, 32
    %v1094 = vpop.permute.xlu0 %1093
    %v1096 = vadd.f32 %v1086, %v1094
    %v1097 = vtanh.pop %v1096
    %1099 = vrot.lane.b32.xlu0 %v1097, 64
    %v1100 = vpop.permute.xlu0 %1099
    %v1102 = vmul.f32 %v1084, %v1100
    %1104 = vrot.lane.b32.xlu0 %v1102, 32
    %v1105 = vpop.permute.xlu0 %1104
    %1107 = vst.msk [vmem:[#allocation3 + $0xe] sm:$0x3] %vm385, %v1105
    %1108 = vst.msk [vmem:[#allocation10] sm:$0x3] %vm385, %v1105
    %1110 = vrot.lane.b32.xlu0 %v1096, 96
    %v1111 = vpop.permute.xlu0 %1110
    %1113 = vst.msk [vmem:[#allocation11] sm:$0x3] %vm385, %v1111
    %v1114 = vld [vmem:[#allocation3] sm:$0xff]
    %v1115 = vld [vmem:[#allocation3 + $0x8] sm:$0xff]
    %v1116 = vld [vmem:[%s8] sm:$0xff]
    %v1117 = vld [vmem:[%s8 + $0x8] sm:$0xff]
    %v1118 = vld [vmem:[%s8 + $0x10] sm:$0xff]
    %v1119 = vld [vmem:[%s8 + $0x18] sm:$0xff]
    %v1120 = vld [vmem:[%s9] sm:$0x1]
    %v1122 = vlaneseq
    %v1123 = vshrl.u32 %v1122, 7
    %v1124 = vsub.s32 0, %v1123
    %v1125 = vrot.slane %v1120, %v1124
    %v1128 = vsel %vm94, %v1114, 0
    %v1131 = vsel %vm94, %v1115, 0
    %1133 = vmatprep.subr.mxu0 0.0
    %1134 = vmatpush1.msra.mxu0 0.0
    %1135 = vmatprep.subr.mxu0 0.0
    %1136 = vmatpush1.msra.mxu0 0.0
    %1137 = vmatprep.subr.mxu0 0.0
    %1138 = vmatpush1.msra.mxu0 0.0
    %1139 = vmatprep.subr.mxu0 0.0
    %1140 = vmatpush1.msra.mxu0 0.0
    %1141 = vmatprep.subr.mxu0 0.0
    %1142 = vmatpush1.msra.mxu0 0.0
    %1143 = vmatprep.subr.mxu0 0.0
    %1144 = vmatpush1.msra.mxu0 0.0
    %1145 = vmatprep.subr.mxu0 0.0
    %1146 = vmatpush1.msra.mxu0 0.0
    %1147 = vmatprep.subr.mxu0 0.0
    %1148 = vmatpush1.msra.mxu0 0.0
    %1149 = vmatprep.subr.mxu0 0.0
    %1150 = vmatpush1.msra.mxu0 0.0
    %1151 = vmatprep.subr.mxu0 0.0
    %1152 = vmatpush1.msra.mxu0 0.0
    %1153 = vmatprep.subr.mxu0 0.0
    %1154 = vmatpush1.msra.mxu0 0.0
    %1155 = vmatprep.subr.mxu0 0.0
    %1156 = vmatpush1.msra.mxu0 0.0
    %1157 = vmatprep.subr.mxu0 0.0
    %1158 = vmatpush1.msra.mxu0 %v1119
    %1159 = vmatprep.subr.mxu0 0.0
    %1160 = vmatpush1.msra.mxu0 %v1118
    %1161 = vmatprep.subr.mxu0 0.0
    %1162 = vmatpush1.msra.mxu0 %v1117
    %1163 = vmatprep.subr.mxu0 0.0
    %1164 = vmatpush1.msra.mxu0 %v1116
    %1165 = vmatprep.subr.mxu0 0.0
    %1166 = vmatpush2.msra.mxu0 0.0
    %1167 = vmatprep.subr.mxu0 0.0
    %1168 = vmatpush2.msra.mxu0 0.0
    %1169 = vmatprep.subr.mxu0 0.0
    %1170 = vmatpush2.msra.mxu0 0.0
    %1171 = vmatprep.subr.mxu0 0.0
    %1172 = vmatpush2.msra.mxu0 0.0
    %1173 = vmatprep.subr.mxu0 0.0
    %1174 = vmatpush2.msra.mxu0 0.0
    %1175 = vmatprep.subr.mxu0 0.0
    %1176 = vmatpush2.msra.mxu0 0.0
    %1177 = vmatprep.subr.mxu0 0.0
    %1178 = vmatpush2.msra.mxu0 0.0
    %1179 = vmatprep.subr.mxu0 0.0
    %1180 = vmatpush2.msra.mxu0 0.0
    %1181 = vmatprep.subr.mxu0 0.0
    %1182 = vmatpush2.msra.mxu0 0.0
    %1183 = vmatprep.subr.mxu0 0.0
    %1184 = vmatpush2.msra.mxu0 0.0
    %1185 = vmatprep.subr.mxu0 0.0
    %1186 = vmatpush2.msra.mxu0 0.0
    %1187 = vmatprep.subr.mxu0 0.0
    %1188 = vmatpush2.msra.mxu0 0.0
    %1189 = vmatprep.subr.mxu0 0.0
    %1190 = vmatpush2.msra.mxu0 0.0
    %1191 = vmatprep.subr.mxu0 0.0
    %1192 = vmatpush2.msra.mxu0 0.0
    %1193 = vmatprep.subr.mxu0 0.0
    %1194 = vmatpush2.msra.mxu0 0.0
    %1195 = vmatprep.subr.mxu0 0.0
    %1196 = vmatpush2.msra.mxu0 0.0
    %1197 = vmatprep.mubr.f32.mxu0 0.0
    %1198 = vmatmul.mubr.f32.gmra.mxu0 %v1128
    %v1199 = vpop.f32.mrf.mxu0
    %v1200 = vadd.f32 %v1125, %v1199
    %v1201 = vpop.f32.mrf.mxu0
    %1202 = vmatprep.mubr.f32.mxu0 0.0
    %1203 = vmatmul.mubr.f32.gmra.mxu0 %v1131
    %v1204 = vpop.f32.mrf.mxu0
    %v1205 = vadd.f32 %v1125, %v1204
    %v1206 = vpop.f32.mrf.mxu0
    %1207 = vdwg.mxu0
    %vm1208 = vcmask 31744
    %v1209 = vsel %vm1208, %v1200, -inf
    %1210 = vmax.xlane.f32.xlu0 %v1209
    %v1211 = vpop.xlane.xlu0 %1210
    %v1212 = vsel %vm1208, %v1205, -inf
    %1213 = vmax.xlane.f32.xlu0 %v1212
    %v1214 = vpop.xlane.xlu0 %1213
    %v1215 = vsub.f32 %v1200, %v1211
    %v1216 = vsub.f32 %v1205, %v1214
    %v1217 = vmul.f32 %v1215, 1.442695
    %v1218 = vpow.pop %v1217
    %v1219 = vmul.f32 %v1216, 1.442695
    %v1220 = vpow.pop %v1219
    %v1221 = vsel %vm1208, %v1218, 0.0
    %1222 = vadd.xlane.f32.xlu0 %v1221
    %v1223 = vpop.xlane.xlu0 %1222
    %v1224 = vsel %vm1208, %v1220, 0.0
    %1225 = vadd.xlane.f32.xlu0 %v1224
    %v1226 = vpop.xlane.xlu0 %1225
    %v1227 = vrcp.pop %v1223
    %v1228 = vrcp.pop %v1226
    %v1229 = vmul.f32 %v1218, %v1227
    %v1230 = vmul.f32 %v1220, %v1228
    %1231 = vst.msk [vmem:[%s10] sm:$0xff] %vm1208, %v1229
    %1232 = vst.msk [vmem:[%s10 + $0x8] sm:$0xff] %vm1208, %v1230
    // Predicated region
    $region54: #{tpu_custom_call.1} parent=1 // pred_check
      _
    $region55: #{tpu_custom_call.1} parent=1 // pred_check_branch
      %1234 = sbr.rel (0) target = $region57
    $region56: #{tpu_custom_call.1} parent=1 // pred_region
      _
    $region57: #{tpu_custom_call.1} parent=1 // pred_fallthru
      _
    // Predicated region
    $region58: #{tpu_custom_call.1} parent=1 // pred_check
      _
    $region59: #{tpu_custom_call.1} parent=1 // pred_check_branch
      %1236 = sbr.rel (0) target = $region61
    $region60: #{tpu_custom_call.1} parent=1 // pred_region
      %s1238 = ssub.s32 32, 32
      %1239 = vsyncadd [#allocation6], %s1238
      %s1241 = sshll.u32 [#allocation10], 4
      %s1242 = int_to_ptr.vmem [resolvable:$true] %s1241
      %1244 = dma.vmem_to_hbm [thread:$0]  %s1242, 32, %s11, [#allocation6]
    $region61: #{tpu_custom_call.1} parent=1 // pred_fallthru
      _
    // Predicated region
    $region62: #{tpu_custom_call.1} parent=1 // pred_check
      _
    $region63: #{tpu_custom_call.1} parent=1 // pred_check_branch
      %1246 = sbr.rel (0) target = $region65
    $region64: #{tpu_custom_call.1} parent=1 // pred_region
      %s1248 = ssub.s32 32, 32
      %1249 = vsyncadd [#allocation12], %s1248
      %s1251 = sshll.u32 [#allocation11], 4
      %s1252 = int_to_ptr.vmem [resolvable:$true] %s1251
      %1254 = dma.vmem_to_hbm [thread:$0]  %s1252, 32, %s12, [#allocation12]
    $region65: #{tpu_custom_call.1} parent=1 // pred_fallthru
      _
    // Predicated region
    $region66: #{tpu_custom_call.1} parent=1 // pred_check
      _
    $region67: #{tpu_custom_call.1} parent=1 // pred_check_branch
      %1256 = sbr.rel (0) target = $region69
    $region68: #{tpu_custom_call.1} parent=1 // pred_region
      _
    $region69: #{tpu_custom_call.1} parent=1 // pred_fallthru
      _
    // Predicated region
    $region70: #{tpu_custom_call.1} parent=1 // pred_check
      _
    $region71: #{tpu_custom_call.1} parent=1 // pred_check_branch
      %1258 = sbr.rel (0) target = $region73
    $region72: #{tpu_custom_call.1} parent=1 // pred_region
      %1259 = dma.done [#allocation6], 32
    $region73: #{tpu_custom_call.1} parent=1 // pred_fallthru
      _
    // Predicated region
    $region74: #{tpu_custom_call.1} parent=1 // pred_check
      _
    $region75: #{tpu_custom_call.1} parent=1 // pred_check_branch
      %1261 = sbr.rel (0) target = $region77
    $region76: #{tpu_custom_call.1} parent=1 // pred_region
      %1262 = dma.done [#allocation12], 32
    $region77: #{tpu_custom_call.1} parent=1 // pred_fallthru
      _
    %1263 = vsyncpa [#allocation5], 1
    %1264 = vsyncpa [#allocation8], 1
    %1265 = vsyncpa [#allocation6], 1
    %1266 = vsyncpa [#allocation12], 1

</llo_original>
